<compile_context>
chip_gen: v7x
topology: tpu7x:2x2x1
jax: 0.10.0
libtpu: 0.0.40
codegen_flags: <defaults>
</compile_context>

<pallas_src>
import jax
import jax.numpy as jnp
from jax.experimental import pallas as pl
from jax.experimental.pallas import tpu as pltpu

OBS_DIM = 16      # config.observation_shape = (16,)
EMB_HID = 32      # episodic_emb_block out_size
OUT_HID = 64      # episodic_out_block out_size
ACTION_NUM = 4    # config.action_num
LN_EPS = 1e-5     # torch.nn.LayerNorm default eps

# Row offsets inside the packed weight slab (lane width = OUT_HID = 64).
R_EMB = 0                      # rows 0:16 , cols 0:32  -> w_emb   (16, 32)
R_OUT_A = R_EMB + OBS_DIM      # rows 16:48             -> w_out_a (32, 64)
R_OUT_B = R_OUT_A + EMB_HID    # rows 48:80             -> w_out_b (32, 64)
R_FC = R_OUT_B + EMB_HID       # rows 80:144, cols 0:4  -> w_fc'   (64, 4)
W_ROWS = R_FC + OUT_HID        # 144 (multiple of 16 -> bf16 sublane aligned)


def _embedding_kernel(x1_ref, x2_ref, w_ref, b_ref, o_ref):
    mm = w_ref.dtype                      # matmul operand dtype (f32 or bf16)
    x1 = x1_ref[...].astype(mm)           # (tile, 16)
    x2 = x2_ref[...].astype(mm)           # (tile, 16)

    # Static slices of the resident parameter slabs (one-time per grid step).
    w_emb = w_ref[R_EMB:R_EMB + OBS_DIM, 0:EMB_HID]        # (16, 32)
    w_out_a = w_ref[R_OUT_A:R_OUT_A + EMB_HID, :]          # (32, 64)
    w_out_b = w_ref[R_OUT_B:R_OUT_B + EMB_HID, :]          # (32, 64)
    w_fc = w_ref[R_FC:R_FC + OUT_HID, 0:ACTION_NUM]        # (64, 4)  (LN affine folded)
    b_emb = b_ref[0:1, 0:EMB_HID]                          # (1, 32) f32
    b_out = b_ref[1:2, :]                                  # (1, 64) f32
    b_fc = b_ref[2:3, 0:ACTION_NUM]                        # (1, 4)  f32

    # emb_block on both observation streams (shared weights), ReLU.  f32 acc.
    e1 = jnp.maximum(
        jnp.dot(x1, w_emb, preferred_element_type=jnp.float32) + b_emb, 0.0)
    e2 = jnp.maximum(
        jnp.dot(x2, w_emb, preferred_element_type=jnp.float32) + b_emb, 0.0)

    # out_block on the (implicit) concatenation: [e1|e2] @ w_out == e1@Wa + e2@Wb.
    h = jnp.maximum(
        jnp.dot(e1.astype(mm), w_out_a, preferred_element_type=jnp.float32)
        + jnp.dot(e2.astype(mm), w_out_b, preferred_element_type=jnp.float32)
        + b_out, 0.0)                                       # (tile, 64) f32

    # LayerNorm (PyTorch semantics: biased variance, eps inside rsqrt).
    # The affine (gamma/beta) was folded into w_fc / b_fc at init time.
    mu = jnp.mean(h, axis=-1, keepdims=True)
    var = jnp.mean((h - mu) * (h - mu), axis=-1, keepdims=True)
    hn = (h - mu) * jax.lax.rsqrt(var + LN_EPS)

    # Final Linear + exact softmax (dim=1).
    logits = (jnp.dot(hn.astype(mm), w_fc, preferred_element_type=jnp.float32)
              + b_fc)                                       # (tile, 4) f32
    m = jnp.max(logits, axis=-1, keepdims=True)
    p = jnp.exp(logits - m)
    o_ref[...] = (p / jnp.sum(p, axis=-1, keepdims=True)).astype(o_ref.dtype)


def prepare_params(params, matmul_dtype=jnp.float32):
    """One-time (init-time) parameter preprocessing: fold, split, pack.

    Returns (wslab, bslab):
      wslab: (144, 64) in `matmul_dtype` — all matmul weights in one slab.
      bslab: (3, 64)   f32               — all biases (elementwise math stays f32).
    """
    (w_emb, b_emb, w_out, b_out, gamma, beta, w_fc, b_fc) = params

    # Fold LayerNorm affine into the final FC (exact algebraic identity):
    #   (hn*gamma + beta) @ w_fc + b_fc == hn @ (diag(gamma) @ w_fc) + (beta @ w_fc + b_fc)
    w_fc_f = w_fc * gamma.reshape(OUT_HID, 1)
    b_fc_f = beta @ w_fc + b_fc

    # Split the out_block weight so the kernel never concatenates activations.
    w_out_a = w_out[:EMB_HID]       # acts on emb(x[0])
    w_out_b = w_out[EMB_HID:]       # acts on emb(x[1])

    wslab = jnp.zeros((W_ROWS, OUT_HID), jnp.float32)
    wslab = wslab.at[R_EMB:R_EMB + OBS_DIM, :EMB_HID].set(w_emb)
    wslab = wslab.at[R_OUT_A:R_OUT_A + EMB_HID, :].set(w_out_a)
    wslab = wslab.at[R_OUT_B:R_OUT_B + EMB_HID, :].set(w_out_b)
    wslab = wslab.at[R_FC:R_FC + OUT_HID, :ACTION_NUM].set(w_fc_f)

    bslab = jnp.zeros((3, OUT_HID), jnp.float32)
    bslab = bslab.at[0, :EMB_HID].set(b_emb[0])
    bslab = bslab.at[1, :].set(b_out[0])
    bslab = bslab.at[2, :ACTION_NUM].set(b_fc_f[0])

    return wslab.astype(matmul_dtype), bslab


def embedding_network_forward(x, wslab, bslab, *, batch_tile=None):
    """x: (2, B, OBS_DIM).  Returns softmax action probabilities (B, ACTION_NUM).

    batch_tile=None -> grid of 1 (best for single-TC v5e/v6e at small/medium B).
    Pass batch_tile = B // 2 to split the batch across v7x's two TensorCores.
    """
    x1, x2 = x[0], x[1]                       # cheap leading-dim slices, no concat
    B = x1.shape[0]
    if batch_tile is None:
        batch_tile = B
    assert B % batch_tile == 0, "B must be divisible by batch_tile"
    assert batch_tile % 8 == 0 or batch_tile == B, "batch_tile must be 8-aligned"

    grid_spec = pltpu.PrefetchScalarGridSpec(
        num_scalar_prefetch=0,
        grid=(B // batch_tile,),
        in_specs=[
            pl.BlockSpec((batch_tile, OBS_DIM), lambda i: (i, 0)),   # x[0] tile
            pl.BlockSpec((batch_tile, OBS_DIM), lambda i: (i, 0)),   # x[1] tile
            pl.BlockSpec(wslab.shape, lambda i: (0, 0)),             # weight slab
            pl.BlockSpec(bslab.shape, lambda i: (0, 0)),             # bias slab
        ],
        out_specs=pl.BlockSpec((batch_tile, ACTION_NUM), lambda i: (i, 0)),
    )

    return pl.pallas_call(
        _embedding_kernel,
        out_shape=jax.ShapeDtypeStruct((B, ACTION_NUM), jnp.float32),
        grid_spec=grid_spec,
        compiler_params=pltpu.CompilerParams(
            dimension_semantics=("parallel",)),
    )(x1, x2, wslab, bslab)


def embedding_network_reference(x, params):
    """Pure-JAX reference matching the PyTorch forward pass exactly."""
    (w_emb, b_emb, w_out, b_out, gamma, beta, w_fc, b_fc) = params
    e1 = jnp.maximum(x[0] @ w_emb + b_emb, 0.0)
    e2 = jnp.maximum(x[1] @ w_emb + b_emb, 0.0)
    h = jnp.maximum(jnp.concatenate([e1, e2], axis=-1) @ w_out + b_out, 0.0)
    mu = jnp.mean(h, axis=-1, keepdims=True)
    var = jnp.mean((h - mu) ** 2, axis=-1, keepdims=True)
    hn = (h - mu) / jnp.sqrt(var + LN_EPS) * gamma + beta
    logits = hn @ w_fc + b_fc
    return jax.nn.softmax(logits, axis=-1)


def init_params(key):
    """Deterministic synthetic parameters (stored as (in, out) for x @ W).

    gamma/beta are non-trivial so the LayerNorm-affine fold is actually tested.
    """
    ks = jax.random.split(key, 8)

    def uni(k, shape, fan_in):
        bound = 1.0 / jnp.sqrt(fan_in)
        return jax.random.uniform(k, shape, jnp.float32, -bound, bound)

    w_emb = uni(ks[0], (OBS_DIM, EMB_HID), OBS_DIM)
    b_emb = uni(ks[1], (1, EMB_HID), OBS_DIM)
    w_out = uni(ks[2], (2 * EMB_HID, OUT_HID), 2 * EMB_HID)
    b_out = uni(ks[3], (1, OUT_HID), 2 * EMB_HID)
    gamma = 1.0 + 0.1 * jax.random.normal(ks[4], (1, OUT_HID), jnp.float32)
    beta = 0.1 * jax.random.normal(ks[5], (1, OUT_HID), jnp.float32)
    w_fc = uni(ks[6], (OUT_HID, ACTION_NUM), OUT_HID)
    b_fc = uni(ks[7], (1, ACTION_NUM), OUT_HID)
    return (w_emb, b_emb, w_out, b_out, gamma, beta, w_fc, b_fc)


if __name__ == "__main__":
    key = jax.random.PRNGKey(0)
    k_x, k_p = jax.random.split(key)

    B = 256
    x = jax.random.normal(k_x, (2, B, OBS_DIM), dtype=jnp.float32)
    params = init_params(k_p)
    ref = embedding_network_reference(x, params)

    # --- f32 path, single grid step (default: single-TC v5e/v6e sizing) ------
    wslab, bslab = prepare_params(params)            # done ONCE at init time
    probs = jax.block_until_ready(embedding_network_forward(x, wslab, bslab))
    assert probs.shape == (B, ACTION_NUM)
    assert bool(jnp.all(jnp.isfinite(probs)))
    assert bool(jnp.all(jnp.abs(jnp.sum(probs, axis=1) - 1.0) < 1e-5))  # exact softmax
    assert bool(jnp.max(jnp.abs(probs - ref)) < 1e-4)

    # --- same numerics with a 2-way "parallel" batch split (v7x megacore) ----
    probs_t = jax.block_until_ready(
        embedding_network_forward(x, wslab, bslab, batch_tile=B // 2))
    assert bool(jnp.max(jnp.abs(probs_t - ref)) < 1e-4)

    # --- bf16 matmul path (v6e/v7x MXU-native); LN/softmax stay f32 ----------
    wslab_bf, bslab_f = prepare_params(params, matmul_dtype=jnp.bfloat16)
    probs_bf = jax.block_until_ready(
        embedding_network_forward(x.astype(jnp.bfloat16), wslab_bf, bslab_f))
    assert bool(jnp.all(jnp.abs(jnp.sum(probs_bf, axis=1) - 1.0) < 1e-5))
    assert bool(jnp.max(jnp.abs(probs_bf - ref)) < 5e-2)   # bf16 operand rounding

    print("KERNEL_OK")
</pallas_src>

<mosaic_0001>
module attributes {stable_mosaic.version = 11 : i64} {
  func.func @_embedding_kernel(%arg0: i32, %arg1: memref<256x16xf32, #tpu.memory_space<vmem>>, %arg2: memref<256x16xf32, #tpu.memory_space<vmem>>, %arg3: memref<144x64xf32, #tpu.memory_space<vmem>>, %arg4: memref<3x64xf32, #tpu.memory_space<vmem>>, %arg5: memref<256x4xf32, #tpu.memory_space<vmem>>) attributes {dimension_semantics = [#tpu.dimension_semantics<parallel>], iteration_bounds = array<i64: 1>, scalar_prefetch = 0 : i64, scratch_operands = 0 : i64, tpu.core_type = #tpu.core_type<tc>, window_params = [{transform_indices = @transform_0, window_bounds = array<i64: 256, 16>}, {transform_indices = @transform_1, window_bounds = array<i64: 256, 16>}, {pipeline_mode = #tpu.pipeline_mode<synchronous>, transform_indices = @transform_2, window_bounds = array<i64: 144, 64>}, {pipeline_mode = #tpu.pipeline_mode<synchronous>, transform_indices = @transform_3, window_bounds = array<i64: 3, 64>}, {transform_indices = @transform_4, window_bounds = array<i64: 256, 4>}]} {
    %c0 = arith.constant 0 : index
    %c0_0 = arith.constant 0 : index
    %0 = vector.load %arg1[%c0, %c0_0] : memref<256x16xf32, #tpu.memory_space<vmem>>, vector<256x16xf32>
    %c0_1 = arith.constant 0 : index
    %c0_2 = arith.constant 0 : index
    %1 = vector.load %arg2[%c0_1, %c0_2] : memref<256x16xf32, #tpu.memory_space<vmem>>, vector<256x16xf32>
    %c0_3 = arith.constant 0 : index
    %c0_4 = arith.constant 0 : index
    %2 = vector.load %arg3[%c0_3, %c0_4] : memref<144x64xf32, #tpu.memory_space<vmem>>, vector<16x32xf32>
    %c16 = arith.constant 16 : index
    %c0_5 = arith.constant 0 : index
    %3 = vector.load %arg3[%c16, %c0_5] : memref<144x64xf32, #tpu.memory_space<vmem>>, vector<32x64xf32>
    %c48 = arith.constant 48 : index
    %c0_6 = arith.constant 0 : index
    %4 = vector.load %arg3[%c48, %c0_6] : memref<144x64xf32, #tpu.memory_space<vmem>>, vector<32x64xf32>
    %c80 = arith.constant 80 : index
    %c0_7 = arith.constant 0 : index
    %5 = vector.load %arg3[%c80, %c0_7] : memref<144x64xf32, #tpu.memory_space<vmem>>, vector<64x4xf32>
    %c0_8 = arith.constant 0 : index
    %c0_9 = arith.constant 0 : index
    %6 = vector.load %arg4[%c0_8, %c0_9] : memref<3x64xf32, #tpu.memory_space<vmem>>, vector<1x32xf32>
    %c1 = arith.constant 1 : index
    %c0_10 = arith.constant 0 : index
    %7 = vector.load %arg4[%c1, %c0_10] : memref<3x64xf32, #tpu.memory_space<vmem>>, vector<1x64xf32>
    %c2 = arith.constant 2 : index
    %c0_11 = arith.constant 0 : index
    %8 = vector.load %arg4[%c2, %c0_11] : memref<3x64xf32, #tpu.memory_space<vmem>>, vector<1x4xf32>
    %cst = arith.constant dense<0.000000e+00> : vector<256x32xf32>
    %9 = tpu.matmul %0, %2, %cst {dimension_numbers = #tpu.dot_dimension_numbers<[1], [0], [0], [1], [0, 0, 1, 1], [], []>} : vector<256x16xf32>, vector<16x32xf32>, vector<256x32xf32> -> vector<256x32xf32>
    %10 = vector.broadcast %6 : vector<1x32xf32> to vector<256x32xf32>
    %11 = arith.addf %9, %10 : vector<256x32xf32>
    %cst_12 = arith.constant 0.000000e+00 : f32
    %12 = vector.broadcast %cst_12 : f32 to vector<256x32xf32>
    %13 = arith.maximumf %11, %12 : vector<256x32xf32>
    %cst_13 = arith.constant dense<0.000000e+00> : vector<256x32xf32>
    %14 = tpu.matmul %1, %2, %cst_13 {dimension_numbers = #tpu.dot_dimension_numbers<[1], [0], [0], [1], [0, 0, 1, 1], [], []>} : vector<256x16xf32>, vector<16x32xf32>, vector<256x32xf32> -> vector<256x32xf32>
    %15 = vector.broadcast %6 : vector<1x32xf32> to vector<256x32xf32>
    %16 = arith.addf %14, %15 : vector<256x32xf32>
    %cst_14 = arith.constant 0.000000e+00 : f32
    %17 = vector.broadcast %cst_14 : f32 to vector<256x32xf32>
    %18 = arith.maximumf %16, %17 : vector<256x32xf32>
    %cst_15 = arith.constant dense<0.000000e+00> : vector<256x64xf32>
    %19 = tpu.matmul %13, %3, %cst_15 {dimension_numbers = #tpu.dot_dimension_numbers<[1], [0], [0], [1], [0, 0, 1, 1], [], []>} : vector<256x32xf32>, vector<32x64xf32>, vector<256x64xf32> -> vector<256x64xf32>
    %cst_16 = arith.constant dense<0.000000e+00> : vector<256x64xf32>
    %20 = tpu.matmul %18, %4, %cst_16 {dimension_numbers = #tpu.dot_dimension_numbers<[1], [0], [0], [1], [0, 0, 1, 1], [], []>} : vector<256x32xf32>, vector<32x64xf32>, vector<256x64xf32> -> vector<256x64xf32>
    %21 = arith.addf %19, %20 : vector<256x64xf32>
    %22 = vector.broadcast %7 : vector<1x64xf32> to vector<256x64xf32>
    %23 = arith.addf %21, %22 : vector<256x64xf32>
    %cst_17 = arith.constant 0.000000e+00 : f32
    %24 = vector.broadcast %cst_17 : f32 to vector<256x64xf32>
    %25 = arith.maximumf %23, %24 : vector<256x64xf32>
    %cst_18 = arith.constant dense<0.000000e+00> : vector<256xf32>
    %26 = vector.multi_reduction <add>, %25, %cst_18 [1] : vector<256x64xf32> to vector<256xf32>
    %27 = vector.shape_cast %26 : vector<256xf32> to vector<256x1xf32>
    %cst_19 = arith.constant 6.400000e+01 : f32
    %28 = vector.broadcast %cst_19 : f32 to vector<256x1xf32>
    %29 = arith.divf %27, %28 : vector<256x1xf32>
    %30 = vector.broadcast %29 : vector<256x1xf32> to vector<256x64xf32>
    %31 = arith.subf %25, %30 : vector<256x64xf32>
    %32 = vector.broadcast %29 : vector<256x1xf32> to vector<256x64xf32>
    %33 = arith.subf %25, %32 : vector<256x64xf32>
    %34 = arith.mulf %31, %33 : vector<256x64xf32>
    %cst_20 = arith.constant dense<0.000000e+00> : vector<256xf32>
    %35 = vector.multi_reduction <add>, %34, %cst_20 [1] : vector<256x64xf32> to vector<256xf32>
    %36 = vector.shape_cast %35 : vector<256xf32> to vector<256x1xf32>
    %cst_21 = arith.constant 6.400000e+01 : f32
    %37 = vector.broadcast %cst_21 : f32 to vector<256x1xf32>
    %38 = arith.divf %36, %37 : vector<256x1xf32>
    %39 = vector.broadcast %29 : vector<256x1xf32> to vector<256x64xf32>
    %40 = arith.subf %25, %39 : vector<256x64xf32>
    %cst_22 = arith.constant 9.99999974E-6 : f32
    %41 = vector.broadcast %cst_22 : f32 to vector<256x1xf32>
    %42 = arith.addf %38, %41 : vector<256x1xf32>
    %43 = math.rsqrt %42 : vector<256x1xf32>
    %44 = vector.broadcast %43 : vector<256x1xf32> to vector<256x64xf32>
    %45 = arith.mulf %40, %44 : vector<256x64xf32>
    %cst_23 = arith.constant dense<0.000000e+00> : vector<256x4xf32>
    %46 = tpu.matmul %45, %5, %cst_23 {dimension_numbers = #tpu.dot_dimension_numbers<[1], [0], [0], [1], [0, 0, 1, 1], [], []>} : vector<256x64xf32>, vector<64x4xf32>, vector<256x4xf32> -> vector<256x4xf32>
    %47 = vector.broadcast %8 : vector<1x4xf32> to vector<256x4xf32>
    %48 = arith.addf %46, %47 : vector<256x4xf32>
    %cst_24 = arith.constant dense<0xFF800000> : vector<256xf32>
    %49 = vector.multi_reduction <maximumf>, %48, %cst_24 [1] : vector<256x4xf32> to vector<256xf32>
    %50 = vector.shape_cast %49 : vector<256xf32> to vector<256x1xf32>
    %51 = vector.broadcast %50 : vector<256x1xf32> to vector<256x4xf32>
    %52 = arith.subf %48, %51 : vector<256x4xf32>
    %53 = math.exp %52 : vector<256x4xf32>
    %cst_25 = arith.constant dense<0.000000e+00> : vector<256xf32>
    %54 = vector.multi_reduction <add>, %53, %cst_25 [1] : vector<256x4xf32> to vector<256xf32>
    %55 = vector.shape_cast %54 : vector<256xf32> to vector<256x1xf32>
    %56 = vector.broadcast %55 : vector<256x1xf32> to vector<256x4xf32>
    %57 = arith.divf %53, %56 : vector<256x4xf32>
    %c0_26 = arith.constant 0 : index
    %c0_27 = arith.constant 0 : index
    %58 = vector.load %arg5[%c0_26, %c0_27] : memref<256x4xf32, #tpu.memory_space<vmem>>, vector<256x4xf32>
    tpu.vector_store %arg5[%c0_26, %c0_27], %57 {strides = array<i32>} : memref<256x4xf32, #tpu.memory_space<vmem>>, vector<256x4xf32>,
    return
  }
  func.func @transform_0(%arg0: i32) -> (i32, i32) {
    %c0_i32 = arith.constant 0 : i32
    %c0_i32_0 = arith.constant 0 : i32
    return %arg0, %c0_i32 : i32, i32
  }
  func.func @transform_1(%arg0: i32) -> (i32, i32) {
    %c0_i32 = arith.constant 0 : i32
    %c0_i32_0 = arith.constant 0 : i32
    return %arg0, %c0_i32 : i32, i32
  }
  func.func @transform_2(%arg0: i32) -> (i32, i32) {
    %c0_i32 = arith.constant 0 : i32
    %c0_i32_0 = arith.constant 0 : i32
    %c0_i32_1 = arith.constant 0 : i32
    return %c0_i32, %c0_i32_0 : i32, i32
  }
  func.func @transform_3(%arg0: i32) -> (i32, i32) {
    %c0_i32 = arith.constant 0 : i32
    %c0_i32_0 = arith.constant 0 : i32
    %c0_i32_1 = arith.constant 0 : i32
    return %c0_i32, %c0_i32_0 : i32, i32
  }
  func.func @transform_4(%arg0: i32) -> (i32, i32) {
    %c0_i32 = arith.constant 0 : i32
    %c0_i32_0 = arith.constant 0 : i32
    return %arg0, %c0_i32 : i32, i32
  }
}

</mosaic_0001>

<llo_original>
// kernel: tpu_custom_call.1
$region0: #{tpu_custom_call.1}
  #allocation0 [shape = 'u32[]', space=smem, size = 0x4, offset = 0x4, fixed_abs, tag = 'smem constant byte address 0x4 - core index']
  #allocation1 [shape = 'u32[144,128]{1,0:T(1,128)}', space=vmem, size = 0x12000, scoped, tag = 'internal scratch']
  %s0 = inlined_call_operand.vmem [shape: f32[256,16], index: 0, kind: input, shape index: {}]
  %s1 = inlined_call_operand.vmem [shape: f32[256,16], index: 1, kind: input, shape index: {}]
  %s2 = inlined_call_operand.vmem [shape: f32[144,64], index: 2, kind: input, shape index: {}]
  %s3 = inlined_call_operand.vmem [shape: f32[3,64], index: 3, kind: input, shape index: {}]
  %s4 = inlined_call_operand.vmem [shape: f32[256,4], index: 4, kind: output, shape index: {}]
  %s5 = sld [smem:[#allocation0]]
  $region26: #{tpu_custom_call.1} parent=0
    _
  %s7 = ssub.s32 1, %s5
  %s8 = scalar_select 0, %s7, %s5
  // Predicated region
  $region2: #{tpu_custom_call.1} parent=0 // pred_check
    _
  $region3: #{tpu_custom_call.1} parent=0 // pred_check_branch
    %10 = sbr.rel (0) target = $region5
  $region4: #{tpu_custom_call.1} parent=0 // pred_region
    _
  $region5: #{tpu_custom_call.1} parent=0 // pred_fallthru
    _
  // Predicated region
  $region6: #{tpu_custom_call.1} parent=0 // pred_check
    _
  $region7: #{tpu_custom_call.1} parent=0 // pred_check_branch
    %12 = sbr.rel (0) target = $region9
  $region8: #{tpu_custom_call.1} parent=0 // pred_region
    _
  $region9: #{tpu_custom_call.1} parent=0 // pred_fallthru
    _
  // Predicated region
  $region10: #{tpu_custom_call.1} parent=0 // pred_check
    _
  $region11: #{tpu_custom_call.1} parent=0 // pred_check_branch
    %14 = sbr.rel (0) target = $region13
  $region12: #{tpu_custom_call.1} parent=0 // pred_region
    _
  $region13: #{tpu_custom_call.1} parent=0 // pred_fallthru
    _
  // Predicated region
  $region14: #{tpu_custom_call.1} parent=0 // pred_check
    _
  $region15: #{tpu_custom_call.1} parent=0 // pred_check_branch
    %16 = sbr.rel (0) target = $region17
  $region16: #{tpu_custom_call.1} parent=0 // pred_region
    _
  $region17: #{tpu_custom_call.1} parent=0 // pred_fallthru
    _
  %v17 = vld [vmem:[%s0] sm:$0xff]
  %v18 = vld [vmem:[%s0 + $0x8] sm:$0xff]
  %v19 = vld [vmem:[%s0 + $0x10] sm:$0xff]
  %v20 = vld [vmem:[%s0 + $0x18] sm:$0xff]
  %v21 = vld [vmem:[%s0 + $0x20] sm:$0xff]
  %v22 = vld [vmem:[%s0 + $0x28] sm:$0xff]
  %v23 = vld [vmem:[%s0 + $0x30] sm:$0xff]
  %v24 = vld [vmem:[%s0 + $0x38] sm:$0xff]
  %v25 = vld [vmem:[%s0 + $0x40] sm:$0xff]
  %v26 = vld [vmem:[%s0 + $0x48] sm:$0xff]
  %v27 = vld [vmem:[%s0 + $0x50] sm:$0xff]
  %v28 = vld [vmem:[%s0 + $0x58] sm:$0xff]
  %v29 = vld [vmem:[%s0 + $0x60] sm:$0xff]
  %v30 = vld [vmem:[%s0 + $0x68] sm:$0xff]
  %v31 = vld [vmem:[%s0 + $0x70] sm:$0xff]
  %v32 = vld [vmem:[%s0 + $0x78] sm:$0xff]
  %v33 = vld [vmem:[%s0 + $0x80] sm:$0xff]
  %v34 = vld [vmem:[%s0 + $0x88] sm:$0xff]
  %v35 = vld [vmem:[%s0 + $0x90] sm:$0xff]
  %v36 = vld [vmem:[%s0 + $0x98] sm:$0xff]
  %v37 = vld [vmem:[%s0 + $0xa0] sm:$0xff]
  %v38 = vld [vmem:[%s0 + $0xa8] sm:$0xff]
  %v39 = vld [vmem:[%s0 + $0xb0] sm:$0xff]
  %v40 = vld [vmem:[%s0 + $0xb8] sm:$0xff]
  %v41 = vld [vmem:[%s0 + $0xc0] sm:$0xff]
  %v42 = vld [vmem:[%s0 + $0xc8] sm:$0xff]
  %v43 = vld [vmem:[%s0 + $0xd0] sm:$0xff]
  %v44 = vld [vmem:[%s0 + $0xd8] sm:$0xff]
  %v45 = vld [vmem:[%s0 + $0xe0] sm:$0xff]
  %v46 = vld [vmem:[%s0 + $0xe8] sm:$0xff]
  %v47 = vld [vmem:[%s0 + $0xf0] sm:$0xff]
  %v48 = vld [vmem:[%s0 + $0xf8] sm:$0xff]
  %v49 = vld [vmem:[%s1] sm:$0xff]
  %v50 = vld [vmem:[%s1 + $0x8] sm:$0xff]
  %v51 = vld [vmem:[%s1 + $0x10] sm:$0xff]
  %v52 = vld [vmem:[%s1 + $0x18] sm:$0xff]
  %v53 = vld [vmem:[%s1 + $0x20] sm:$0xff]
  %v54 = vld [vmem:[%s1 + $0x28] sm:$0xff]
  %v55 = vld [vmem:[%s1 + $0x30] sm:$0xff]
  %v56 = vld [vmem:[%s1 + $0x38] sm:$0xff]
  %v57 = vld [vmem:[%s1 + $0x40] sm:$0xff]
  %v58 = vld [vmem:[%s1 + $0x48] sm:$0xff]
  %v59 = vld [vmem:[%s1 + $0x50] sm:$0xff]
  %v60 = vld [vmem:[%s1 + $0x58] sm:$0xff]
  %v61 = vld [vmem:[%s1 + $0x60] sm:$0xff]
  %v62 = vld [vmem:[%s1 + $0x68] sm:$0xff]
  %v63 = vld [vmem:[%s1 + $0x70] sm:$0xff]
  %v64 = vld [vmem:[%s1 + $0x78] sm:$0xff]
  %v65 = vld [vmem:[%s1 + $0x80] sm:$0xff]
  %v66 = vld [vmem:[%s1 + $0x88] sm:$0xff]
  %v67 = vld [vmem:[%s1 + $0x90] sm:$0xff]
  %v68 = vld [vmem:[%s1 + $0x98] sm:$0xff]
  %v69 = vld [vmem:[%s1 + $0xa0] sm:$0xff]
  %v70 = vld [vmem:[%s1 + $0xa8] sm:$0xff]
  %v71 = vld [vmem:[%s1 + $0xb0] sm:$0xff]
  %v72 = vld [vmem:[%s1 + $0xb8] sm:$0xff]
  %v73 = vld [vmem:[%s1 + $0xc0] sm:$0xff]
  %v74 = vld [vmem:[%s1 + $0xc8] sm:$0xff]
  %v75 = vld [vmem:[%s1 + $0xd0] sm:$0xff]
  %v76 = vld [vmem:[%s1 + $0xd8] sm:$0xff]
  %v77 = vld [vmem:[%s1 + $0xe0] sm:$0xff]
  %v78 = vld [vmem:[%s1 + $0xe8] sm:$0xff]
  %v79 = vld [vmem:[%s1 + $0xf0] sm:$0xff]
  %v80 = vld [vmem:[%s1 + $0xf8] sm:$0xff]
  %v81 = vld [vmem:[%s2] sm:$0xff]
  %v82 = vld [vmem:[%s2 + $0x8] sm:$0xff]
  %v83 = vld [vmem:[%s2 + $0x10] sm:$0xff]
  %v84 = vld [vmem:[%s2 + $0x18] sm:$0xff]
  %v85 = vld [vmem:[%s2 + $0x20] sm:$0xff]
  %v86 = vld [vmem:[%s2 + $0x28] sm:$0xff]
  %v87 = vld [vmem:[%s2 + $0x30] sm:$0xff]
  %v88 = vld [vmem:[%s2 + $0x38] sm:$0xff]
  %v89 = vld [vmem:[%s2 + $0x40] sm:$0xff]
  %v90 = vld [vmem:[%s2 + $0x48] sm:$0xff]
  %v91 = vld [vmem:[%s2 + $0x50] sm:$0xff]
  %v92 = vld [vmem:[%s2 + $0x58] sm:$0xff]
  %v93 = vld [vmem:[%s2 + $0x60] sm:$0xff]
  %v94 = vld [vmem:[%s2 + $0x68] sm:$0xff]
  %v95 = vld [vmem:[%s2 + $0x70] sm:$0xff]
  %v96 = vld [vmem:[%s2 + $0x78] sm:$0xff]
  %v97 = vld [vmem:[%s2 + $0x80] sm:$0xff]
  %v98 = vld [vmem:[%s2 + $0x88] sm:$0xff]
  %v99 = vld [vmem:[%s3] sm:$0x1]
  %v100 = vld [vmem:[%s3 + $0x1] sm:$0x1]
  %v101 = vld [vmem:[%s3 + $0x2] sm:$0x1]
  %v102 = vlaneseq
  %v103 = vshrl.u32 %v102, 7
  %v104 = vsub.s32 0, %v103
  %v105 = vrot.slane %v99, %v104
  %vm106 = vcmask 130048
  %v108 = vsel %vm106, %v17, 0
  %v111 = vsel %vm106, %v18, 0
  %v114 = vsel %vm106, %v19, 0
  %v117 = vsel %vm106, %v20, 0
  %v120 = vsel %vm106, %v21, 0
  %v123 = vsel %vm106, %v22, 0
  %v126 = vsel %vm106, %v23, 0
  %v129 = vsel %vm106, %v24, 0
  %v132 = vsel %vm106, %v25, 0
  %v135 = vsel %vm106, %v26, 0
  %v138 = vsel %vm106, %v27, 0
  %v141 = vsel %vm106, %v28, 0
  %v144 = vsel %vm106, %v29, 0
  %v147 = vsel %vm106, %v30, 0
  %v150 = vsel %vm106, %v31, 0
  %v153 = vsel %vm106, %v32, 0
  %v156 = vsel %vm106, %v33, 0
  %v159 = vsel %vm106, %v34, 0
  %v162 = vsel %vm106, %v35, 0
  %v165 = vsel %vm106, %v36, 0
  %v168 = vsel %vm106, %v37, 0
  %v171 = vsel %vm106, %v38, 0
  %v174 = vsel %vm106, %v39, 0
  %v177 = vsel %vm106, %v40, 0
  %v180 = vsel %vm106, %v41, 0
  %v183 = vsel %vm106, %v42, 0
  %v186 = vsel %vm106, %v43, 0
  %v189 = vsel %vm106, %v44, 0
  %v192 = vsel %vm106, %v45, 0
  %v195 = vsel %vm106, %v46, 0
  %v198 = vsel %vm106, %v47, 0
  %v201 = vsel %vm106, %v48, 0
  %203 = vmatprep.subr.mxu0 0.0
  %204 = vmatpush1.msra.mxu0 %v81
  %205 = vmatprep.subr.mxu0 0.0
  %206 = vmatpush1.msra.mxu0 %v82
  %207 = vmatprep.subr.mxu0 0.0
  %208 = vmatpush1.msra.mxu0 0.0
  %209 = vmatprep.subr.mxu0 0.0
  %210 = vmatpush1.msra.mxu0 0.0
  %211 = vmatprep.subr.mxu0 0.0
  %212 = vmatpush1.msra.mxu0 0.0
  %213 = vmatprep.subr.mxu0 0.0
  %214 = vmatpush1.msra.mxu0 0.0
  %215 = vmatprep.subr.mxu0 0.0
  %216 = vmatpush1.msra.mxu0 0.0
  %217 = vmatprep.subr.mxu0 0.0
  %218 = vmatpush1.msra.mxu0 0.0
  %219 = vmatprep.subr.mxu0 0.0
  %220 = vmatpush1.msra.mxu0 0.0
  %221 = vmatprep.subr.mxu0 0.0
  %222 = vmatpush1.msra.mxu0 0.0
  %223 = vmatprep.subr.mxu0 0.0
  %224 = vmatpush1.msra.mxu0 0.0
  %225 = vmatprep.subr.mxu0 0.0
  %226 = vmatpush1.msra.mxu0 0.0
  %227 = vmatprep.subr.mxu0 0.0
  %228 = vmatpush1.msra.mxu0 0.0
  %229 = vmatprep.subr.mxu0 0.0
  %230 = vmatpush1.msra.mxu0 0.0
  %231 = vmatprep.subr.mxu0 0.0
  %232 = vmatpush1.msra.mxu0 0.0
  %233 = vmatprep.subr.mxu0 0.0
  %234 = vmatpush1.msra.mxu0 0.0
  %235 = vmatprep.subr.mxu0 0.0
  %236 = vmatpush1.msra.mxu0 0.0
  %237 = vmatprep.subr.mxu0 0.0
  %238 = vmatpush1.msra.mxu0 0.0
  %239 = vmatprep.subr.mxu0 0.0
  %240 = vmatpush1.msra.mxu0 0.0
  %241 = vmatprep.subr.mxu0 0.0
  %242 = vmatpush1.msra.mxu0 0.0
  %243 = vmatprep.subr.mxu0 0.0
  %244 = vmatpush1.msra.mxu0 0.0
  %245 = vmatprep.subr.mxu0 0.0
  %246 = vmatpush1.msra.mxu0 0.0
  %247 = vmatprep.subr.mxu0 0.0
  %248 = vmatpush1.msra.mxu0 0.0
  %249 = vmatprep.subr.mxu0 0.0
  %250 = vmatpush1.msra.mxu0 0.0
  %251 = vmatprep.subr.mxu0 0.0
  %252 = vmatpush1.msra.mxu0 0.0
  %253 = vmatprep.subr.mxu0 0.0
  %254 = vmatpush1.msra.mxu0 0.0
  %255 = vmatprep.subr.mxu0 0.0
  %256 = vmatpush1.msra.mxu0 0.0
  %257 = vmatprep.subr.mxu0 0.0
  %258 = vmatpush1.msra.mxu0 0.0
  %259 = vmatprep.subr.mxu0 0.0
  %260 = vmatpush1.msra.mxu0 0.0
  %261 = vmatprep.subr.mxu0 0.0
  %262 = vmatpush1.msra.mxu0 0.0
  %263 = vmatprep.subr.mxu0 0.0
  %264 = vmatpush1.msra.mxu0 0.0
  %265 = vmatprep.subr.mxu0 0.0
  %266 = vmatpush1.msra.mxu0 0.0
  %267 = vmatprep.mubr.f32.mxu0 0.0
  %268 = vmatmul.mubr.f32.gmra.mrb[0].mxu0 %v108
  %v269 = vpop.f32.mrb[0].mxu0
  %v270 = vadd.f32 %v105, %v269
  %v271 = vpop.f32.mrb[0].mxu0
  %272 = vmatprep.mubr.f32.mxu0 0.0
  %273 = vmatmul.mubr.f32.gmra.mrb[0].mxu0 %v111
  %v274 = vpop.f32.mrb[0].mxu0
  %v275 = vadd.f32 %v105, %v274
  %v276 = vpop.f32.mrb[0].mxu0
  %277 = vmatprep.mubr.f32.mxu0 0.0
  %278 = vmatmul.mubr.f32.gmra.mrb[0].mxu0 %v114
  %v279 = vpop.f32.mrb[0].mxu0
  %v280 = vadd.f32 %v105, %v279
  %v281 = vpop.f32.mrb[0].mxu0
  %282 = vmatprep.mubr.f32.mxu0 0.0
  %283 = vmatmul.mubr.f32.gmra.mrb[0].mxu0 %v117
  %v284 = vpop.f32.mrb[0].mxu0
  %v285 = vadd.f32 %v105, %v284
  %v286 = vpop.f32.mrb[0].mxu0
  %287 = vmatprep.mubr.f32.mxu0 0.0
  %288 = vmatmul.mubr.f32.gmra.mrb[0].mxu0 %v120
  %v289 = vpop.f32.mrb[0].mxu0
  %v290 = vadd.f32 %v105, %v289
  %v291 = vpop.f32.mrb[0].mxu0
  %292 = vmatprep.mubr.f32.mxu0 0.0
  %293 = vmatmul.mubr.f32.gmra.mrb[0].mxu0 %v123
  %v294 = vpop.f32.mrb[0].mxu0
  %v295 = vadd.f32 %v105, %v294
  %v296 = vpop.f32.mrb[0].mxu0
  %297 = vmatprep.mubr.f32.mxu0 0.0
  %298 = vmatmul.mubr.f32.gmra.mrb[0].mxu0 %v126
  %v299 = vpop.f32.mrb[0].mxu0
  %v300 = vadd.f32 %v105, %v299
  %v301 = vpop.f32.mrb[0].mxu0
  %302 = vmatprep.mubr.f32.mxu0 0.0
  %303 = vmatmul.mubr.f32.gmra.mrb[0].mxu0 %v129
  %v304 = vpop.f32.mrb[0].mxu0
  %v305 = vadd.f32 %v105, %v304
  %v306 = vpop.f32.mrb[0].mxu0
  %307 = vmatprep.mubr.f32.mxu0 0.0
  %308 = vmatmul.mubr.f32.gmra.mrb[0].mxu0 %v132
  %v309 = vpop.f32.mrb[0].mxu0
  %v310 = vadd.f32 %v105, %v309
  %v311 = vpop.f32.mrb[0].mxu0
  %312 = vmatprep.mubr.f32.mxu0 0.0
  %313 = vmatmul.mubr.f32.gmra.mrb[0].mxu0 %v135
  %v314 = vpop.f32.mrb[0].mxu0
  %v315 = vadd.f32 %v105, %v314
  %v316 = vpop.f32.mrb[0].mxu0
  %317 = vmatprep.mubr.f32.mxu0 0.0
  %318 = vmatmul.mubr.f32.gmra.mrb[0].mxu0 %v138
  %v319 = vpop.f32.mrb[0].mxu0
  %v320 = vadd.f32 %v105, %v319
  %v321 = vpop.f32.mrb[0].mxu0
  %322 = vmatprep.mubr.f32.mxu0 0.0
  %323 = vmatmul.mubr.f32.gmra.mrb[0].mxu0 %v141
  %v324 = vpop.f32.mrb[0].mxu0
  %v325 = vadd.f32 %v105, %v324
  %v326 = vpop.f32.mrb[0].mxu0
  %327 = vmatprep.mubr.f32.mxu0 0.0
  %328 = vmatmul.mubr.f32.gmra.mrb[0].mxu0 %v144
  %v329 = vpop.f32.mrb[0].mxu0
  %v330 = vadd.f32 %v105, %v329
  %v331 = vpop.f32.mrb[0].mxu0
  %332 = vmatprep.mubr.f32.mxu0 0.0
  %333 = vmatmul.mubr.f32.gmra.mrb[0].mxu0 %v147
  %v334 = vpop.f32.mrb[0].mxu0
  %v335 = vadd.f32 %v105, %v334
  %v336 = vpop.f32.mrb[0].mxu0
  %337 = vmatprep.mubr.f32.mxu0 0.0
  %338 = vmatmul.mubr.f32.gmra.mrb[0].mxu0 %v150
  %v339 = vpop.f32.mrb[0].mxu0
  %v340 = vadd.f32 %v105, %v339
  %v341 = vpop.f32.mrb[0].mxu0
  %342 = vmatprep.mubr.f32.mxu0 0.0
  %343 = vmatmul.mubr.f32.gmra.mrb[0].mxu0 %v153
  %v344 = vpop.f32.mrb[0].mxu0
  %v345 = vadd.f32 %v105, %v344
  %v346 = vpop.f32.mrb[0].mxu0
  %347 = vmatprep.mubr.f32.mxu0 0.0
  %348 = vmatmul.mubr.f32.gmra.mrb[0].mxu0 %v156
  %v349 = vpop.f32.mrb[0].mxu0
  %v350 = vadd.f32 %v105, %v349
  %v351 = vpop.f32.mrb[0].mxu0
  %352 = vmatprep.mubr.f32.mxu0 0.0
  %353 = vmatmul.mubr.f32.gmra.mrb[0].mxu0 %v159
  %v354 = vpop.f32.mrb[0].mxu0
  %v355 = vadd.f32 %v105, %v354
  %v356 = vpop.f32.mrb[0].mxu0
  %357 = vmatprep.mubr.f32.mxu0 0.0
  %358 = vmatmul.mubr.f32.gmra.mrb[0].mxu0 %v162
  %v359 = vpop.f32.mrb[0].mxu0
  %v360 = vadd.f32 %v105, %v359
  %v361 = vpop.f32.mrb[0].mxu0
  %362 = vmatprep.mubr.f32.mxu0 0.0
  %363 = vmatmul.mubr.f32.gmra.mrb[0].mxu0 %v165
  %v364 = vpop.f32.mrb[0].mxu0
  %v365 = vadd.f32 %v105, %v364
  %v366 = vpop.f32.mrb[0].mxu0
  %367 = vmatprep.mubr.f32.mxu0 0.0
  %368 = vmatmul.mubr.f32.gmra.mrb[0].mxu0 %v168
  %v369 = vpop.f32.mrb[0].mxu0
  %v370 = vadd.f32 %v105, %v369
  %v371 = vpop.f32.mrb[0].mxu0
  %372 = vmatprep.mubr.f32.mxu0 0.0
  %373 = vmatmul.mubr.f32.gmra.mrb[0].mxu0 %v171
  %v374 = vpop.f32.mrb[0].mxu0
  %v375 = vadd.f32 %v105, %v374
  %v376 = vpop.f32.mrb[0].mxu0
  %377 = vmatprep.mubr.f32.mxu0 0.0
  %378 = vmatmul.mubr.f32.gmra.mrb[0].mxu0 %v174
  %v379 = vpop.f32.mrb[0].mxu0
  %v380 = vadd.f32 %v105, %v379
  %v381 = vpop.f32.mrb[0].mxu0
  %382 = vmatprep.mubr.f32.mxu0 0.0
  %383 = vmatmul.mubr.f32.gmra.mrb[0].mxu0 %v177
  %v384 = vpop.f32.mrb[0].mxu0
  %v385 = vadd.f32 %v105, %v384
  %v386 = vpop.f32.mrb[0].mxu0
  %387 = vmatprep.mubr.f32.mxu0 0.0
  %388 = vmatmul.mubr.f32.gmra.mrb[0].mxu0 %v180
  %v389 = vpop.f32.mrb[0].mxu0
  %v390 = vadd.f32 %v105, %v389
  %v391 = vpop.f32.mrb[0].mxu0
  %392 = vmatprep.mubr.f32.mxu0 0.0
  %393 = vmatmul.mubr.f32.gmra.mrb[0].mxu0 %v183
  %v394 = vpop.f32.mrb[0].mxu0
  %v395 = vadd.f32 %v105, %v394
  %v396 = vpop.f32.mrb[0].mxu0
  %397 = vmatprep.mubr.f32.mxu0 0.0
  %398 = vmatmul.mubr.f32.gmra.mrb[0].mxu0 %v186
  %v399 = vpop.f32.mrb[0].mxu0
  %v400 = vadd.f32 %v105, %v399
  %v401 = vpop.f32.mrb[0].mxu0
  %402 = vmatprep.mubr.f32.mxu0 0.0
  %403 = vmatmul.mubr.f32.gmra.mrb[0].mxu0 %v189
  %v404 = vpop.f32.mrb[0].mxu0
  %v405 = vadd.f32 %v105, %v404
  %v406 = vpop.f32.mrb[0].mxu0
  %407 = vmatprep.mubr.f32.mxu0 0.0
  %408 = vmatmul.mubr.f32.gmra.mrb[0].mxu0 %v192
  %v409 = vpop.f32.mrb[0].mxu0
  %v410 = vadd.f32 %v105, %v409
  %v411 = vpop.f32.mrb[0].mxu0
  %412 = vmatprep.mubr.f32.mxu0 0.0
  %413 = vmatmul.mubr.f32.gmra.mrb[0].mxu0 %v195
  %v414 = vpop.f32.mrb[0].mxu0
  %v415 = vadd.f32 %v105, %v414
  %v416 = vpop.f32.mrb[0].mxu0
  %417 = vmatprep.mubr.f32.mxu0 0.0
  %418 = vmatmul.mubr.f32.gmra.mrb[0].mxu0 %v198
  %v419 = vpop.f32.mrb[0].mxu0
  %v420 = vadd.f32 %v105, %v419
  %v421 = vpop.f32.mrb[0].mxu0
  %422 = vmatprep.mubr.f32.mxu0 0.0
  %423 = vmatmul.mubr.f32.gmra.mrb[0].mxu0 %v201
  %v424 = vpop.f32.mrb[0].mxu0
  %v425 = vadd.f32 %v105, %v424
  %v426 = vpop.f32.mrb[0].mxu0
  %427 = vdwg.mxu0
  %v428 = vmax.f32 %v270, 0.0
  %v429 = vmax.f32 %v275, 0.0
  %v430 = vmax.f32 %v280, 0.0
  %v431 = vmax.f32 %v285, 0.0
  %v432 = vmax.f32 %v290, 0.0
  %v433 = vmax.f32 %v295, 0.0
  %v434 = vmax.f32 %v300, 0.0
  %v435 = vmax.f32 %v305, 0.0
  %v436 = vmax.f32 %v310, 0.0
  %v437 = vmax.f32 %v315, 0.0
  %v438 = vmax.f32 %v320, 0.0
  %v439 = vmax.f32 %v325, 0.0
  %v440 = vmax.f32 %v330, 0.0
  %v441 = vmax.f32 %v335, 0.0
  %v442 = vmax.f32 %v340, 0.0
  %v443 = vmax.f32 %v345, 0.0
  %v444 = vmax.f32 %v350, 0.0
  %v445 = vmax.f32 %v355, 0.0
  %v446 = vmax.f32 %v360, 0.0
  %v447 = vmax.f32 %v365, 0.0
  %v448 = vmax.f32 %v370, 0.0
  %v449 = vmax.f32 %v375, 0.0
  %v450 = vmax.f32 %v380, 0.0
  %v451 = vmax.f32 %v385, 0.0
  %v452 = vmax.f32 %v390, 0.0
  %v453 = vmax.f32 %v395, 0.0
  %v454 = vmax.f32 %v400, 0.0
  %v455 = vmax.f32 %v405, 0.0
  %v456 = vmax.f32 %v410, 0.0
  %v457 = vmax.f32 %v415, 0.0
  %v458 = vmax.f32 %v420, 0.0
  %v459 = vmax.f32 %v425, 0.0
  %v461 = vsel %vm106, %v49, 0
  %v464 = vsel %vm106, %v50, 0
  %v467 = vsel %vm106, %v51, 0
  %v470 = vsel %vm106, %v52, 0
  %v473 = vsel %vm106, %v53, 0
  %v476 = vsel %vm106, %v54, 0
  %v479 = vsel %vm106, %v55, 0
  %v482 = vsel %vm106, %v56, 0
  %v485 = vsel %vm106, %v57, 0
  %v488 = vsel %vm106, %v58, 0
  %v491 = vsel %vm106, %v59, 0
  %v494 = vsel %vm106, %v60, 0
  %v497 = vsel %vm106, %v61, 0
  %v500 = vsel %vm106, %v62, 0
  %v503 = vsel %vm106, %v63, 0
  %v506 = vsel %vm106, %v64, 0
  %v509 = vsel %vm106, %v65, 0
  %v512 = vsel %vm106, %v66, 0
  %v515 = vsel %vm106, %v67, 0
  %v518 = vsel %vm106, %v68, 0
  %v521 = vsel %vm106, %v69, 0
  %v524 = vsel %vm106, %v70, 0
  %v527 = vsel %vm106, %v71, 0
  %v530 = vsel %vm106, %v72, 0
  %v533 = vsel %vm106, %v73, 0
  %v536 = vsel %vm106, %v74, 0
  %v539 = vsel %vm106, %v75, 0
  %v542 = vsel %vm106, %v76, 0
  %v545 = vsel %vm106, %v77, 0
  %v548 = vsel %vm106, %v78, 0
  %v551 = vsel %vm106, %v79, 0
  %v554 = vsel %vm106, %v80, 0
  %556 = vmatprep.subr.mxu0 0.0
  %557 = vmatpush1.msra.mxu0 %v81
  %558 = vmatprep.subr.mxu0 0.0
  %559 = vmatpush1.msra.mxu0 %v82
  %560 = vmatprep.subr.mxu0 0.0
  %561 = vmatpush1.msra.mxu0 0.0
  %562 = vmatprep.subr.mxu0 0.0
  %563 = vmatpush1.msra.mxu0 0.0
  %564 = vmatprep.subr.mxu0 0.0
  %565 = vmatpush1.msra.mxu0 0.0
  %566 = vmatprep.subr.mxu0 0.0
  %567 = vmatpush1.msra.mxu0 0.0
  %568 = vmatprep.subr.mxu0 0.0
  %569 = vmatpush1.msra.mxu0 0.0
  %570 = vmatprep.subr.mxu0 0.0
  %571 = vmatpush1.msra.mxu0 0.0
  %572 = vmatprep.subr.mxu0 0.0
  %573 = vmatpush1.msra.mxu0 0.0
  %574 = vmatprep.subr.mxu0 0.0
  %575 = vmatpush1.msra.mxu0 0.0
  %576 = vmatprep.subr.mxu0 0.0
  %577 = vmatpush1.msra.mxu0 0.0
  %578 = vmatprep.subr.mxu0 0.0
  %579 = vmatpush1.msra.mxu0 0.0
  %580 = vmatprep.subr.mxu0 0.0
  %581 = vmatpush1.msra.mxu0 0.0
  %582 = vmatprep.subr.mxu0 0.0
  %583 = vmatpush1.msra.mxu0 0.0
  %584 = vmatprep.subr.mxu0 0.0
  %585 = vmatpush1.msra.mxu0 0.0
  %586 = vmatprep.subr.mxu0 0.0
  %587 = vmatpush1.msra.mxu0 0.0
  %588 = vmatprep.subr.mxu0 0.0
  %589 = vmatpush1.msra.mxu0 0.0
  %590 = vmatprep.subr.mxu0 0.0
  %591 = vmatpush1.msra.mxu0 0.0
  %592 = vmatprep.subr.mxu0 0.0
  %593 = vmatpush1.msra.mxu0 0.0
  %594 = vmatprep.subr.mxu0 0.0
  %595 = vmatpush1.msra.mxu0 0.0
  %596 = vmatprep.subr.mxu0 0.0
  %597 = vmatpush1.msra.mxu0 0.0
  %598 = vmatprep.subr.mxu0 0.0
  %599 = vmatpush1.msra.mxu0 0.0
  %600 = vmatprep.subr.mxu0 0.0
  %601 = vmatpush1.msra.mxu0 0.0
  %602 = vmatprep.subr.mxu0 0.0
  %603 = vmatpush1.msra.mxu0 0.0
  %604 = vmatprep.subr.mxu0 0.0
  %605 = vmatpush1.msra.mxu0 0.0
  %606 = vmatprep.subr.mxu0 0.0
  %607 = vmatpush1.msra.mxu0 0.0
  %608 = vmatprep.subr.mxu0 0.0
  %609 = vmatpush1.msra.mxu0 0.0
  %610 = vmatprep.subr.mxu0 0.0
  %611 = vmatpush1.msra.mxu0 0.0
  %612 = vmatprep.subr.mxu0 0.0
  %613 = vmatpush1.msra.mxu0 0.0
  %614 = vmatprep.subr.mxu0 0.0
  %615 = vmatpush1.msra.mxu0 0.0
  %616 = vmatprep.subr.mxu0 0.0
  %617 = vmatpush1.msra.mxu0 0.0
  %618 = vmatprep.subr.mxu0 0.0
  %619 = vmatpush1.msra.mxu0 0.0
  %620 = vmatprep.mubr.f32.mxu0 0.0
  %621 = vmatmul.mubr.f32.gmra.mrb[0].mxu0 %v461
  %v622 = vpop.f32.mrb[0].mxu0
  %v623 = vadd.f32 %v105, %v622
  %v624 = vpop.f32.mrb[0].mxu0
  %625 = vmatprep.mubr.f32.mxu0 0.0
  %626 = vmatmul.mubr.f32.gmra.mrb[0].mxu0 %v464
  %v627 = vpop.f32.mrb[0].mxu0
  %v628 = vadd.f32 %v105, %v627
  %v629 = vpop.f32.mrb[0].mxu0
  %630 = vmatprep.mubr.f32.mxu0 0.0
  %631 = vmatmul.mubr.f32.gmra.mrb[0].mxu0 %v467
  %v632 = vpop.f32.mrb[0].mxu0
  %v633 = vadd.f32 %v105, %v632
  %v634 = vpop.f32.mrb[0].mxu0
  %635 = vmatprep.mubr.f32.mxu0 0.0
  %636 = vmatmul.mubr.f32.gmra.mrb[0].mxu0 %v470
  %v637 = vpop.f32.mrb[0].mxu0
  %v638 = vadd.f32 %v105, %v637
  %v639 = vpop.f32.mrb[0].mxu0
  %640 = vmatprep.mubr.f32.mxu0 0.0
  %641 = vmatmul.mubr.f32.gmra.mrb[0].mxu0 %v473
  %v642 = vpop.f32.mrb[0].mxu0
  %v643 = vadd.f32 %v105, %v642
  %v644 = vpop.f32.mrb[0].mxu0
  %645 = vmatprep.mubr.f32.mxu0 0.0
  %646 = vmatmul.mubr.f32.gmra.mrb[0].mxu0 %v476
  %v647 = vpop.f32.mrb[0].mxu0
  %v648 = vadd.f32 %v105, %v647
  %v649 = vpop.f32.mrb[0].mxu0
  %650 = vmatprep.mubr.f32.mxu0 0.0
  %651 = vmatmul.mubr.f32.gmra.mrb[0].mxu0 %v479
  %v652 = vpop.f32.mrb[0].mxu0
  %v653 = vadd.f32 %v105, %v652
  %v654 = vpop.f32.mrb[0].mxu0
  %655 = vmatprep.mubr.f32.mxu0 0.0
  %656 = vmatmul.mubr.f32.gmra.mrb[0].mxu0 %v482
  %v657 = vpop.f32.mrb[0].mxu0
  %v658 = vadd.f32 %v105, %v657
  %v659 = vpop.f32.mrb[0].mxu0
  %660 = vmatprep.mubr.f32.mxu0 0.0
  %661 = vmatmul.mubr.f32.gmra.mrb[0].mxu0 %v485
  %v662 = vpop.f32.mrb[0].mxu0
  %v663 = vadd.f32 %v105, %v662
  %v664 = vpop.f32.mrb[0].mxu0
  %665 = vmatprep.mubr.f32.mxu0 0.0
  %666 = vmatmul.mubr.f32.gmra.mrb[0].mxu0 %v488
  %v667 = vpop.f32.mrb[0].mxu0
  %v668 = vadd.f32 %v105, %v667
  %v669 = vpop.f32.mrb[0].mxu0
  %670 = vmatprep.mubr.f32.mxu0 0.0
  %671 = vmatmul.mubr.f32.gmra.mrb[0].mxu0 %v491
  %v672 = vpop.f32.mrb[0].mxu0
  %v673 = vadd.f32 %v105, %v672
  %v674 = vpop.f32.mrb[0].mxu0
  %675 = vmatprep.mubr.f32.mxu0 0.0
  %676 = vmatmul.mubr.f32.gmra.mrb[0].mxu0 %v494
  %v677 = vpop.f32.mrb[0].mxu0
  %v678 = vadd.f32 %v105, %v677
  %v679 = vpop.f32.mrb[0].mxu0
  %680 = vmatprep.mubr.f32.mxu0 0.0
  %681 = vmatmul.mubr.f32.gmra.mrb[0].mxu0 %v497
  %v682 = vpop.f32.mrb[0].mxu0
  %v683 = vadd.f32 %v105, %v682
  %v684 = vpop.f32.mrb[0].mxu0
  %685 = vmatprep.mubr.f32.mxu0 0.0
  %686 = vmatmul.mubr.f32.gmra.mrb[0].mxu0 %v500
  %v687 = vpop.f32.mrb[0].mxu0
  %v688 = vadd.f32 %v105, %v687
  %v689 = vpop.f32.mrb[0].mxu0
  %690 = vmatprep.mubr.f32.mxu0 0.0
  %691 = vmatmul.mubr.f32.gmra.mrb[0].mxu0 %v503
  %v692 = vpop.f32.mrb[0].mxu0
  %v693 = vadd.f32 %v105, %v692
  %v694 = vpop.f32.mrb[0].mxu0
  %695 = vmatprep.mubr.f32.mxu0 0.0
  %696 = vmatmul.mubr.f32.gmra.mrb[0].mxu0 %v506
  %v697 = vpop.f32.mrb[0].mxu0
  %v698 = vadd.f32 %v105, %v697
  %v699 = vpop.f32.mrb[0].mxu0
  %700 = vmatprep.mubr.f32.mxu0 0.0
  %701 = vmatmul.mubr.f32.gmra.mrb[0].mxu0 %v509
  %v702 = vpop.f32.mrb[0].mxu0
  %v703 = vadd.f32 %v105, %v702
  %v704 = vpop.f32.mrb[0].mxu0
  %705 = vmatprep.mubr.f32.mxu0 0.0
  %706 = vmatmul.mubr.f32.gmra.mrb[0].mxu0 %v512
  %v707 = vpop.f32.mrb[0].mxu0
  %v708 = vadd.f32 %v105, %v707
  %v709 = vpop.f32.mrb[0].mxu0
  %710 = vmatprep.mubr.f32.mxu0 0.0
  %711 = vmatmul.mubr.f32.gmra.mrb[0].mxu0 %v515
  %v712 = vpop.f32.mrb[0].mxu0
  %v713 = vadd.f32 %v105, %v712
  %v714 = vpop.f32.mrb[0].mxu0
  %715 = vmatprep.mubr.f32.mxu0 0.0
  %716 = vmatmul.mubr.f32.gmra.mrb[0].mxu0 %v518
  %v717 = vpop.f32.mrb[0].mxu0
  %v718 = vadd.f32 %v105, %v717
  %v719 = vpop.f32.mrb[0].mxu0
  %720 = vmatprep.mubr.f32.mxu0 0.0
  %721 = vmatmul.mubr.f32.gmra.mrb[0].mxu0 %v521
  %v722 = vpop.f32.mrb[0].mxu0
  %v723 = vadd.f32 %v105, %v722
  %v724 = vpop.f32.mrb[0].mxu0
  %725 = vmatprep.mubr.f32.mxu0 0.0
  %726 = vmatmul.mubr.f32.gmra.mrb[0].mxu0 %v524
  %v727 = vpop.f32.mrb[0].mxu0
  %v728 = vadd.f32 %v105, %v727
  %v729 = vpop.f32.mrb[0].mxu0
  %730 = vmatprep.mubr.f32.mxu0 0.0
  %731 = vmatmul.mubr.f32.gmra.mrb[0].mxu0 %v527
  %v732 = vpop.f32.mrb[0].mxu0
  %v733 = vadd.f32 %v105, %v732
  %v734 = vpop.f32.mrb[0].mxu0
  %735 = vmatprep.mubr.f32.mxu0 0.0
  %736 = vmatmul.mubr.f32.gmra.mrb[0].mxu0 %v530
  %v737 = vpop.f32.mrb[0].mxu0
  %v738 = vadd.f32 %v105, %v737
  %v739 = vpop.f32.mrb[0].mxu0
  %740 = vmatprep.mubr.f32.mxu0 0.0
  %741 = vmatmul.mubr.f32.gmra.mrb[0].mxu0 %v533
  %v742 = vpop.f32.mrb[0].mxu0
  %v743 = vadd.f32 %v105, %v742
  %v744 = vpop.f32.mrb[0].mxu0
  %745 = vmatprep.mubr.f32.mxu0 0.0
  %746 = vmatmul.mubr.f32.gmra.mrb[0].mxu0 %v536
  %v747 = vpop.f32.mrb[0].mxu0
  %v748 = vadd.f32 %v105, %v747
  %v749 = vpop.f32.mrb[0].mxu0
  %750 = vmatprep.mubr.f32.mxu0 0.0
  %751 = vmatmul.mubr.f32.gmra.mrb[0].mxu0 %v539
  %v752 = vpop.f32.mrb[0].mxu0
  %v753 = vadd.f32 %v105, %v752
  %v754 = vpop.f32.mrb[0].mxu0
  %755 = vmatprep.mubr.f32.mxu0 0.0
  %756 = vmatmul.mubr.f32.gmra.mrb[0].mxu0 %v542
  %v757 = vpop.f32.mrb[0].mxu0
  %v758 = vadd.f32 %v105, %v757
  %v759 = vpop.f32.mrb[0].mxu0
  %760 = vmatprep.mubr.f32.mxu0 0.0
  %761 = vmatmul.mubr.f32.gmra.mrb[0].mxu0 %v545
  %v762 = vpop.f32.mrb[0].mxu0
  %v763 = vadd.f32 %v105, %v762
  %v764 = vpop.f32.mrb[0].mxu0
  %765 = vmatprep.mubr.f32.mxu0 0.0
  %766 = vmatmul.mubr.f32.gmra.mrb[0].mxu0 %v548
  %v767 = vpop.f32.mrb[0].mxu0
  %v768 = vadd.f32 %v105, %v767
  %v769 = vpop.f32.mrb[0].mxu0
  %770 = vmatprep.mubr.f32.mxu0 0.0
  %771 = vmatmul.mubr.f32.gmra.mrb[0].mxu0 %v551
  %v772 = vpop.f32.mrb[0].mxu0
  %v773 = vadd.f32 %v105, %v772
  %v774 = vpop.f32.mrb[0].mxu0
  %775 = vmatprep.mubr.f32.mxu0 0.0
  %776 = vmatmul.mubr.f32.gmra.mrb[0].mxu0 %v554
  %v777 = vpop.f32.mrb[0].mxu0
  %v778 = vadd.f32 %v105, %v777
  %v779 = vpop.f32.mrb[0].mxu0
  %780 = vdwg.mxu0
  %v781 = vmax.f32 %v623, 0.0
  %v782 = vmax.f32 %v628, 0.0
  %v783 = vmax.f32 %v633, 0.0
  %v784 = vmax.f32 %v638, 0.0
  %v785 = vmax.f32 %v643, 0.0
  %v786 = vmax.f32 %v648, 0.0
  %v787 = vmax.f32 %v653, 0.0
  %v788 = vmax.f32 %v658, 0.0
  %v789 = vmax.f32 %v663, 0.0
  %v790 = vmax.f32 %v668, 0.0
  %v791 = vmax.f32 %v673, 0.0
  %v792 = vmax.f32 %v678, 0.0
  %v793 = vmax.f32 %v683, 0.0
  %v794 = vmax.f32 %v688, 0.0
  %v795 = vmax.f32 %v693, 0.0
  %v796 = vmax.f32 %v698, 0.0
  %v797 = vmax.f32 %v703, 0.0
  %v798 = vmax.f32 %v708, 0.0
  %v799 = vmax.f32 %v713, 0.0
  %v800 = vmax.f32 %v718, 0.0
  %v801 = vmax.f32 %v723, 0.0
  %v802 = vmax.f32 %v728, 0.0
  %v803 = vmax.f32 %v733, 0.0
  %v804 = vmax.f32 %v738, 0.0
  %v805 = vmax.f32 %v743, 0.0
  %v806 = vmax.f32 %v748, 0.0
  %v807 = vmax.f32 %v753, 0.0
  %v808 = vmax.f32 %v758, 0.0
  %v809 = vmax.f32 %v763, 0.0
  %v810 = vmax.f32 %v768, 0.0
  %v811 = vmax.f32 %v773, 0.0
  %v812 = vmax.f32 %v778, 0.0
  %vm813 = vcmask 261120
  %v815 = vsel %vm813, %v781, 0
  %v818 = vsel %vm813, %v782, 0
  %v821 = vsel %vm813, %v783, 0
  %v824 = vsel %vm813, %v784, 0
  %v827 = vsel %vm813, %v785, 0
  %v830 = vsel %vm813, %v786, 0
  %v833 = vsel %vm813, %v787, 0
  %v836 = vsel %vm813, %v788, 0
  %v839 = vsel %vm813, %v789, 0
  %v842 = vsel %vm813, %v790, 0
  %v845 = vsel %vm813, %v791, 0
  %v848 = vsel %vm813, %v792, 0
  %v851 = vsel %vm813, %v793, 0
  %v854 = vsel %vm813, %v794, 0
  %v857 = vsel %vm813, %v795, 0
  %v860 = vsel %vm813, %v796, 0
  %v863 = vsel %vm813, %v797, 0
  %v866 = vsel %vm813, %v798, 0
  %v869 = vsel %vm813, %v799, 0
  %v872 = vsel %vm813, %v800, 0
  %v875 = vsel %vm813, %v801, 0
  %v878 = vsel %vm813, %v802, 0
  %v881 = vsel %vm813, %v803, 0
  %v884 = vsel %vm813, %v804, 0
  %v887 = vsel %vm813, %v805, 0
  %v890 = vsel %vm813, %v806, 0
  %v893 = vsel %vm813, %v807, 0
  %v896 = vsel %vm813, %v808, 0
  %v899 = vsel %vm813, %v809, 0
  %v902 = vsel %vm813, %v810, 0
  %v905 = vsel %vm813, %v811, 0
  %v908 = vsel %vm813, %v812, 0
  %910 = vmatprep.subr.mxu0 0.0
  %911 = vmatpush1.msra.mxu0 %v87
  %912 = vmatprep.subr.mxu0 0.0
  %913 = vmatpush1.msra.mxu0 %v88
  %914 = vmatprep.subr.mxu0 0.0
  %915 = vmatpush1.msra.mxu0 %v89
  %916 = vmatprep.subr.mxu0 0.0
  %917 = vmatpush1.msra.mxu0 %v90
  %918 = vmatprep.subr.mxu0 0.0
  %919 = vmatpush1.msra.mxu0 0.0
  %920 = vmatprep.subr.mxu0 0.0
  %921 = vmatpush1.msra.mxu0 0.0
  %922 = vmatprep.subr.mxu0 0.0
  %923 = vmatpush1.msra.mxu0 0.0
  %924 = vmatprep.subr.mxu0 0.0
  %925 = vmatpush1.msra.mxu0 0.0
  %926 = vmatprep.subr.mxu0 0.0
  %927 = vmatpush1.msra.mxu0 0.0
  %928 = vmatprep.subr.mxu0 0.0
  %929 = vmatpush1.msra.mxu0 0.0
  %930 = vmatprep.subr.mxu0 0.0
  %931 = vmatpush1.msra.mxu0 0.0
  %932 = vmatprep.subr.mxu0 0.0
  %933 = vmatpush1.msra.mxu0 0.0
  %934 = vmatprep.subr.mxu0 0.0
  %935 = vmatpush1.msra.mxu0 0.0
  %936 = vmatprep.subr.mxu0 0.0
  %937 = vmatpush1.msra.mxu0 0.0
  %938 = vmatprep.subr.mxu0 0.0
  %939 = vmatpush1.msra.mxu0 0.0
  %940 = vmatprep.subr.mxu0 0.0
  %941 = vmatpush1.msra.mxu0 0.0
  %942 = vmatprep.subr.mxu0 0.0
  %943 = vmatpush1.msra.mxu0 0.0
  %944 = vmatprep.subr.mxu0 0.0
  %945 = vmatpush1.msra.mxu0 0.0
  %946 = vmatprep.subr.mxu0 0.0
  %947 = vmatpush1.msra.mxu0 0.0
  %948 = vmatprep.subr.mxu0 0.0
  %949 = vmatpush1.msra.mxu0 0.0
  %950 = vmatprep.subr.mxu0 0.0
  %951 = vmatpush1.msra.mxu0 0.0
  %952 = vmatprep.subr.mxu0 0.0
  %953 = vmatpush1.msra.mxu0 0.0
  %954 = vmatprep.subr.mxu0 0.0
  %955 = vmatpush1.msra.mxu0 0.0
  %956 = vmatprep.subr.mxu0 0.0
  %957 = vmatpush1.msra.mxu0 0.0
  %958 = vmatprep.subr.mxu0 0.0
  %959 = vmatpush1.msra.mxu0 0.0
  %960 = vmatprep.subr.mxu0 0.0
  %961 = vmatpush1.msra.mxu0 0.0
  %962 = vmatprep.subr.mxu0 0.0
  %963 = vmatpush1.msra.mxu0 0.0
  %964 = vmatprep.subr.mxu0 0.0
  %965 = vmatpush1.msra.mxu0 0.0
  %966 = vmatprep.subr.mxu0 0.0
  %967 = vmatpush1.msra.mxu0 0.0
  %968 = vmatprep.subr.mxu0 0.0
  %969 = vmatpush1.msra.mxu0 0.0
  %970 = vmatprep.subr.mxu0 0.0
  %971 = vmatpush1.msra.mxu0 0.0
  %972 = vmatprep.subr.mxu0 0.0
  %973 = vmatpush1.msra.mxu0 0.0
  %974 = vmatprep.mubr.f32.mxu0 0.0
  %975 = vmatmul.mubr.f32.gmra.mrb[0].mxu0 %v815
  %v976 = vpop.f32.mrb[0].mxu0
  %v977 = vadd.f32 0.0, %v976
  %v978 = vpop.f32.mrb[0].mxu0
  %979 = vmatprep.mubr.f32.mxu0 0.0
  %980 = vmatmul.mubr.f32.gmra.mrb[0].mxu0 %v818
  %v981 = vpop.f32.mrb[0].mxu0
  %v982 = vadd.f32 0.0, %v981
  %v983 = vpop.f32.mrb[0].mxu0
  %984 = vmatprep.mubr.f32.mxu0 0.0
  %985 = vmatmul.mubr.f32.gmra.mrb[0].mxu0 %v821
  %v986 = vpop.f32.mrb[0].mxu0
  %v987 = vadd.f32 0.0, %v986
  %v988 = vpop.f32.mrb[0].mxu0
  %989 = vmatprep.mubr.f32.mxu0 0.0
  %990 = vmatmul.mubr.f32.gmra.mrb[0].mxu0 %v824
  %v991 = vpop.f32.mrb[0].mxu0
  %v992 = vadd.f32 0.0, %v991
  %v993 = vpop.f32.mrb[0].mxu0
  %994 = vmatprep.mubr.f32.mxu0 0.0
  %995 = vmatmul.mubr.f32.gmra.mrb[0].mxu0 %v827
  %v996 = vpop.f32.mrb[0].mxu0
  %v997 = vadd.f32 0.0, %v996
  %v998 = vpop.f32.mrb[0].mxu0
  %999 = vmatprep.mubr.f32.mxu0 0.0
  %1000 = vmatmul.mubr.f32.gmra.mrb[0].mxu0 %v830
  %v1001 = vpop.f32.mrb[0].mxu0
  %v1002 = vadd.f32 0.0, %v1001
  %v1003 = vpop.f32.mrb[0].mxu0
  %1004 = vmatprep.mubr.f32.mxu0 0.0
  %1005 = vmatmul.mubr.f32.gmra.mrb[0].mxu0 %v833
  %v1006 = vpop.f32.mrb[0].mxu0
  %v1007 = vadd.f32 0.0, %v1006
  %v1008 = vpop.f32.mrb[0].mxu0
  %1009 = vmatprep.mubr.f32.mxu0 0.0
  %1010 = vmatmul.mubr.f32.gmra.mrb[0].mxu0 %v836
  %v1011 = vpop.f32.mrb[0].mxu0
  %v1012 = vadd.f32 0.0, %v1011
  %v1013 = vpop.f32.mrb[0].mxu0
  %1014 = vmatprep.mubr.f32.mxu0 0.0
  %1015 = vmatmul.mubr.f32.gmra.mrb[0].mxu0 %v839
  %v1016 = vpop.f32.mrb[0].mxu0
  %v1017 = vadd.f32 0.0, %v1016
  %v1018 = vpop.f32.mrb[0].mxu0
  %1019 = vmatprep.mubr.f32.mxu0 0.0
  %1020 = vmatmul.mubr.f32.gmra.mrb[0].mxu0 %v842
  %v1021 = vpop.f32.mrb[0].mxu0
  %v1022 = vadd.f32 0.0, %v1021
  %v1023 = vpop.f32.mrb[0].mxu0
  %1024 = vmatprep.mubr.f32.mxu0 0.0
  %1025 = vmatmul.mubr.f32.gmra.mrb[0].mxu0 %v845
  %v1026 = vpop.f32.mrb[0].mxu0
  %v1027 = vadd.f32 0.0, %v1026
  %v1028 = vpop.f32.mrb[0].mxu0
  %1029 = vmatprep.mubr.f32.mxu0 0.0
  %1030 = vmatmul.mubr.f32.gmra.mrb[0].mxu0 %v848
  %v1031 = vpop.f32.mrb[0].mxu0
  %v1032 = vadd.f32 0.0, %v1031
  %v1033 = vpop.f32.mrb[0].mxu0
  %1034 = vmatprep.mubr.f32.mxu0 0.0
  %1035 = vmatmul.mubr.f32.gmra.mrb[0].mxu0 %v851
  %v1036 = vpop.f32.mrb[0].mxu0
  %v1037 = vadd.f32 0.0, %v1036
  %v1038 = vpop.f32.mrb[0].mxu0
  %1039 = vmatprep.mubr.f32.mxu0 0.0
  %1040 = vmatmul.mubr.f32.gmra.mrb[0].mxu0 %v854
  %v1041 = vpop.f32.mrb[0].mxu0
  %v1042 = vadd.f32 0.0, %v1041
  %v1043 = vpop.f32.mrb[0].mxu0
  %1044 = vmatprep.mubr.f32.mxu0 0.0
  %1045 = vmatmul.mubr.f32.gmra.mrb[0].mxu0 %v857
  %v1046 = vpop.f32.mrb[0].mxu0
  %v1047 = vadd.f32 0.0, %v1046
  %v1048 = vpop.f32.mrb[0].mxu0
  %1049 = vmatprep.mubr.f32.mxu0 0.0
  %1050 = vmatmul.mubr.f32.gmra.mrb[0].mxu0 %v860
  %v1051 = vpop.f32.mrb[0].mxu0
  %v1052 = vadd.f32 0.0, %v1051
  %v1053 = vpop.f32.mrb[0].mxu0
  %1054 = vmatprep.mubr.f32.mxu0 0.0
  %1055 = vmatmul.mubr.f32.gmra.mrb[0].mxu0 %v863
  %v1056 = vpop.f32.mrb[0].mxu0
  %v1057 = vadd.f32 0.0, %v1056
  %v1058 = vpop.f32.mrb[0].mxu0
  %1059 = vmatprep.mubr.f32.mxu0 0.0
  %1060 = vmatmul.mubr.f32.gmra.mrb[0].mxu0 %v866
  %v1061 = vpop.f32.mrb[0].mxu0
  %v1062 = vadd.f32 0.0, %v1061
  %v1063 = vpop.f32.mrb[0].mxu0
  %1064 = vmatprep.mubr.f32.mxu0 0.0
  %1065 = vmatmul.mubr.f32.gmra.mrb[0].mxu0 %v869
  %v1066 = vpop.f32.mrb[0].mxu0
  %v1067 = vadd.f32 0.0, %v1066
  %v1068 = vpop.f32.mrb[0].mxu0
  %1069 = vmatprep.mubr.f32.mxu0 0.0
  %1070 = vmatmul.mubr.f32.gmra.mrb[0].mxu0 %v872
  %v1071 = vpop.f32.mrb[0].mxu0
  %v1072 = vadd.f32 0.0, %v1071
  %v1073 = vpop.f32.mrb[0].mxu0
  %1074 = vmatprep.mubr.f32.mxu0 0.0
  %1075 = vmatmul.mubr.f32.gmra.mrb[0].mxu0 %v875
  %v1076 = vpop.f32.mrb[0].mxu0
  %v1077 = vadd.f32 0.0, %v1076
  %v1078 = vpop.f32.mrb[0].mxu0
  %1079 = vmatprep.mubr.f32.mxu0 0.0
  %1080 = vmatmul.mubr.f32.gmra.mrb[0].mxu0 %v878
  %v1081 = vpop.f32.mrb[0].mxu0
  %v1082 = vadd.f32 0.0, %v1081
  %v1083 = vpop.f32.mrb[0].mxu0
  %1084 = vmatprep.mubr.f32.mxu0 0.0
  %1085 = vmatmul.mubr.f32.gmra.mrb[0].mxu0 %v881
  %v1086 = vpop.f32.mrb[0].mxu0
  %v1087 = vadd.f32 0.0, %v1086
  %v1088 = vpop.f32.mrb[0].mxu0
  %1089 = vmatprep.mubr.f32.mxu0 0.0
  %1090 = vmatmul.mubr.f32.gmra.mrb[0].mxu0 %v884
  %v1091 = vpop.f32.mrb[0].mxu0
  %v1092 = vadd.f32 0.0, %v1091
  %v1093 = vpop.f32.mrb[0].mxu0
  %1094 = vmatprep.mubr.f32.mxu0 0.0
  %1095 = vmatmul.mubr.f32.gmra.mrb[0].mxu0 %v887
  %v1096 = vpop.f32.mrb[0].mxu0
  %v1097 = vadd.f32 0.0, %v1096
  %v1098 = vpop.f32.mrb[0].mxu0
  %1099 = vmatprep.mubr.f32.mxu0 0.0
  %1100 = vmatmul.mubr.f32.gmra.mrb[0].mxu0 %v890
  %v1101 = vpop.f32.mrb[0].mxu0
  %v1102 = vadd.f32 0.0, %v1101
  %v1103 = vpop.f32.mrb[0].mxu0
  %1104 = vmatprep.mubr.f32.mxu0 0.0
  %1105 = vmatmul.mubr.f32.gmra.mrb[0].mxu0 %v893
  %v1106 = vpop.f32.mrb[0].mxu0
  %v1107 = vadd.f32 0.0, %v1106
  %v1108 = vpop.f32.mrb[0].mxu0
  %1109 = vmatprep.mubr.f32.mxu0 0.0
  %1110 = vmatmul.mubr.f32.gmra.mrb[0].mxu0 %v896
  %v1111 = vpop.f32.mrb[0].mxu0
  %v1112 = vadd.f32 0.0, %v1111
  %v1113 = vpop.f32.mrb[0].mxu0
  %1114 = vmatprep.mubr.f32.mxu0 0.0
  %1115 = vmatmul.mubr.f32.gmra.mrb[0].mxu0 %v899
  %v1116 = vpop.f32.mrb[0].mxu0
  %v1117 = vadd.f32 0.0, %v1116
  %v1118 = vpop.f32.mrb[0].mxu0
  %1119 = vmatprep.mubr.f32.mxu0 0.0
  %1120 = vmatmul.mubr.f32.gmra.mrb[0].mxu0 %v902
  %v1121 = vpop.f32.mrb[0].mxu0
  %v1122 = vadd.f32 0.0, %v1121
  %v1123 = vpop.f32.mrb[0].mxu0
  %1124 = vmatprep.mubr.f32.mxu0 0.0
  %1125 = vmatmul.mubr.f32.gmra.mrb[0].mxu0 %v905
  %v1126 = vpop.f32.mrb[0].mxu0
  %v1127 = vadd.f32 0.0, %v1126
  %v1128 = vpop.f32.mrb[0].mxu0
  %1129 = vmatprep.mubr.f32.mxu0 0.0
  %1130 = vmatmul.mubr.f32.gmra.mrb[0].mxu0 %v908
  %v1131 = vpop.f32.mrb[0].mxu0
  %v1132 = vadd.f32 0.0, %v1131
  %v1133 = vpop.f32.mrb[0].mxu0
  %1134 = vdwg.mxu0
  %v1136 = vsel %vm813, %v428, 0
  %v1139 = vsel %vm813, %v429, 0
  %v1142 = vsel %vm813, %v430, 0
  %v1145 = vsel %vm813, %v431, 0
  %v1148 = vsel %vm813, %v432, 0
  %v1151 = vsel %vm813, %v433, 0
  %v1154 = vsel %vm813, %v434, 0
  %v1157 = vsel %vm813, %v435, 0
  %v1160 = vsel %vm813, %v436, 0
  %v1163 = vsel %vm813, %v437, 0
  %v1166 = vsel %vm813, %v438, 0
  %v1169 = vsel %vm813, %v439, 0
  %v1172 = vsel %vm813, %v440, 0
  %v1175 = vsel %vm813, %v441, 0
  %v1178 = vsel %vm813, %v442, 0
  %v1181 = vsel %vm813, %v443, 0
  %v1184 = vsel %vm813, %v444, 0
  %v1187 = vsel %vm813, %v445, 0
  %v1190 = vsel %vm813, %v446, 0
  %v1193 = vsel %vm813, %v447, 0
  %v1196 = vsel %vm813, %v448, 0
  %v1199 = vsel %vm813, %v449, 0
  %v1202 = vsel %vm813, %v450, 0
  %v1205 = vsel %vm813, %v451, 0
  %v1208 = vsel %vm813, %v452, 0
  %v1211 = vsel %vm813, %v453, 0
  %v1214 = vsel %vm813, %v454, 0
  %v1217 = vsel %vm813, %v455, 0
  %v1220 = vsel %vm813, %v456, 0
  %v1223 = vsel %vm813, %v457, 0
  %v1226 = vsel %vm813, %v458, 0
  %v1229 = vsel %vm813, %v459, 0
  %1231 = vmatprep.subr.mxu0 0.0
  %1232 = vmatpush1.msra.mxu0 %v83
  %1233 = vmatprep.subr.mxu0 0.0
  %1234 = vmatpush1.msra.mxu0 %v84
  %1235 = vmatprep.subr.mxu0 0.0
  %1236 = vmatpush1.msra.mxu0 %v85
  %1237 = vmatprep.subr.mxu0 0.0
  %1238 = vmatpush1.msra.mxu0 %v86
  %1239 = vmatprep.subr.mxu0 0.0
  %1240 = vmatpush1.msra.mxu0 0.0
  %1241 = vmatprep.subr.mxu0 0.0
  %1242 = vmatpush1.msra.mxu0 0.0
  %1243 = vmatprep.subr.mxu0 0.0
  %1244 = vmatpush1.msra.mxu0 0.0
  %1245 = vmatprep.subr.mxu0 0.0
  %1246 = vmatpush1.msra.mxu0 0.0
  %1247 = vmatprep.subr.mxu0 0.0
  %1248 = vmatpush1.msra.mxu0 0.0
  %1249 = vmatprep.subr.mxu0 0.0
  %1250 = vmatpush1.msra.mxu0 0.0
  %1251 = vmatprep.subr.mxu0 0.0
  %1252 = vmatpush1.msra.mxu0 0.0
  %1253 = vmatprep.subr.mxu0 0.0
  %1254 = vmatpush1.msra.mxu0 0.0
  %1255 = vmatprep.subr.mxu0 0.0
  %1256 = vmatpush1.msra.mxu0 0.0
  %1257 = vmatprep.subr.mxu0 0.0
  %1258 = vmatpush1.msra.mxu0 0.0
  %1259 = vmatprep.subr.mxu0 0.0
  %1260 = vmatpush1.msra.mxu0 0.0
  %1261 = vmatprep.subr.mxu0 0.0
  %1262 = vmatpush1.msra.mxu0 0.0
  %1263 = vmatprep.subr.mxu0 0.0
  %1264 = vmatpush1.msra.mxu0 0.0
  %1265 = vmatprep.subr.mxu0 0.0
  %1266 = vmatpush1.msra.mxu0 0.0
  %1267 = vmatprep.subr.mxu0 0.0
  %1268 = vmatpush1.msra.mxu0 0.0
  %1269 = vmatprep.subr.mxu0 0.0
  %1270 = vmatpush1.msra.mxu0 0.0
  %1271 = vmatprep.subr.mxu0 0.0
  %1272 = vmatpush1.msra.mxu0 0.0
  %1273 = vmatprep.subr.mxu0 0.0
  %1274 = vmatpush1.msra.mxu0 0.0
  %1275 = vmatprep.subr.mxu0 0.0
  %1276 = vmatpush1.msra.mxu0 0.0
  %1277 = vmatprep.subr.mxu0 0.0
  %1278 = vmatpush1.msra.mxu0 0.0
  %1279 = vmatprep.subr.mxu0 0.0
  %1280 = vmatpush1.msra.mxu0 0.0
  %1281 = vmatprep.subr.mxu0 0.0
  %1282 = vmatpush1.msra.mxu0 0.0
  %1283 = vmatprep.subr.mxu0 0.0
  %1284 = vmatpush1.msra.mxu0 0.0
  %1285 = vmatprep.subr.mxu0 0.0
  %1286 = vmatpush1.msra.mxu0 0.0
  %1287 = vmatprep.subr.mxu0 0.0
  %1288 = vmatpush1.msra.mxu0 0.0
  %1289 = vmatprep.subr.mxu0 0.0
  %1290 = vmatpush1.msra.mxu0 0.0
  %1291 = vmatprep.subr.mxu0 0.0
  %1292 = vmatpush1.msra.mxu0 0.0
  %1293 = vmatprep.subr.mxu0 0.0
  %1294 = vmatpush1.msra.mxu0 0.0
  %1295 = vmatprep.mubr.f32.mxu0 0.0
  %1296 = vmatmul.mubr.f32.gmra.mrb[0].mxu0 %v1136
  %v1297 = vpop.f32.mrb[0].mxu0
  %v1298 = vadd.f32 %v977, %v1297
  %v1299 = vpop.f32.mrb[0].mxu0
  %1300 = vmatprep.mubr.f32.mxu0 0.0
  %1301 = vmatmul.mubr.f32.gmra.mrb[0].mxu0 %v1139
  %v1302 = vpop.f32.mrb[0].mxu0
  %v1303 = vadd.f32 %v982, %v1302
  %v1304 = vpop.f32.mrb[0].mxu0
  %1305 = vmatprep.mubr.f32.mxu0 0.0
  %1306 = vmatmul.mubr.f32.gmra.mrb[0].mxu0 %v1142
  %v1307 = vpop.f32.mrb[0].mxu0
  %v1308 = vadd.f32 %v987, %v1307
  %v1309 = vpop.f32.mrb[0].mxu0
  %1310 = vmatprep.mubr.f32.mxu0 0.0
  %1311 = vmatmul.mubr.f32.gmra.mrb[0].mxu0 %v1145
  %v1312 = vpop.f32.mrb[0].mxu0
  %v1313 = vadd.f32 %v992, %v1312
  %v1314 = vpop.f32.mrb[0].mxu0
  %1315 = vmatprep.mubr.f32.mxu0 0.0
  %1316 = vmatmul.mubr.f32.gmra.mrb[0].mxu0 %v1148
  %v1317 = vpop.f32.mrb[0].mxu0
  %v1318 = vadd.f32 %v997, %v1317
  %v1319 = vpop.f32.mrb[0].mxu0
  %1320 = vmatprep.mubr.f32.mxu0 0.0
  %1321 = vmatmul.mubr.f32.gmra.mrb[0].mxu0 %v1151
  %v1322 = vpop.f32.mrb[0].mxu0
  %v1323 = vadd.f32 %v1002, %v1322
  %v1324 = vpop.f32.mrb[0].mxu0
  %1325 = vmatprep.mubr.f32.mxu0 0.0
  %1326 = vmatmul.mubr.f32.gmra.mrb[0].mxu0 %v1154
  %v1327 = vpop.f32.mrb[0].mxu0
  %v1328 = vadd.f32 %v1007, %v1327
  %v1329 = vpop.f32.mrb[0].mxu0
  %1330 = vmatprep.mubr.f32.mxu0 0.0
  %1331 = vmatmul.mubr.f32.gmra.mrb[0].mxu0 %v1157
  %v1332 = vpop.f32.mrb[0].mxu0
  %v1333 = vadd.f32 %v1012, %v1332
  %v1334 = vpop.f32.mrb[0].mxu0
  %1335 = vmatprep.mubr.f32.mxu0 0.0
  %1336 = vmatmul.mubr.f32.gmra.mrb[0].mxu0 %v1160
  %v1337 = vpop.f32.mrb[0].mxu0
  %v1338 = vadd.f32 %v1017, %v1337
  %v1339 = vpop.f32.mrb[0].mxu0
  %1340 = vmatprep.mubr.f32.mxu0 0.0
  %1341 = vmatmul.mubr.f32.gmra.mrb[0].mxu0 %v1163
  %v1342 = vpop.f32.mrb[0].mxu0
  %v1343 = vadd.f32 %v1022, %v1342
  %v1344 = vpop.f32.mrb[0].mxu0
  %1345 = vmatprep.mubr.f32.mxu0 0.0
  %1346 = vmatmul.mubr.f32.gmra.mrb[0].mxu0 %v1166
  %v1347 = vpop.f32.mrb[0].mxu0
  %v1348 = vadd.f32 %v1027, %v1347
  %v1349 = vpop.f32.mrb[0].mxu0
  %1350 = vmatprep.mubr.f32.mxu0 0.0
  %1351 = vmatmul.mubr.f32.gmra.mrb[0].mxu0 %v1169
  %v1352 = vpop.f32.mrb[0].mxu0
  %v1353 = vadd.f32 %v1032, %v1352
  %v1354 = vpop.f32.mrb[0].mxu0
  %1355 = vmatprep.mubr.f32.mxu0 0.0
  %1356 = vmatmul.mubr.f32.gmra.mrb[0].mxu0 %v1172
  %v1357 = vpop.f32.mrb[0].mxu0
  %v1358 = vadd.f32 %v1037, %v1357
  %v1359 = vpop.f32.mrb[0].mxu0
  %1360 = vmatprep.mubr.f32.mxu0 0.0
  %1361 = vmatmul.mubr.f32.gmra.mrb[0].mxu0 %v1175
  %v1362 = vpop.f32.mrb[0].mxu0
  %v1363 = vadd.f32 %v1042, %v1362
  %v1364 = vpop.f32.mrb[0].mxu0
  %1365 = vmatprep.mubr.f32.mxu0 0.0
  %1366 = vmatmul.mubr.f32.gmra.mrb[0].mxu0 %v1178
  %v1367 = vpop.f32.mrb[0].mxu0
  %v1368 = vadd.f32 %v1047, %v1367
  %v1369 = vpop.f32.mrb[0].mxu0
  %1370 = vmatprep.mubr.f32.mxu0 0.0
  %1371 = vmatmul.mubr.f32.gmra.mrb[0].mxu0 %v1181
  %v1372 = vpop.f32.mrb[0].mxu0
  %v1373 = vadd.f32 %v1052, %v1372
  %v1374 = vpop.f32.mrb[0].mxu0
  %1375 = vmatprep.mubr.f32.mxu0 0.0
  %1376 = vmatmul.mubr.f32.gmra.mrb[0].mxu0 %v1184
  %v1377 = vpop.f32.mrb[0].mxu0
  %v1378 = vadd.f32 %v1057, %v1377
  %v1379 = vpop.f32.mrb[0].mxu0
  %1380 = vmatprep.mubr.f32.mxu0 0.0
  %1381 = vmatmul.mubr.f32.gmra.mrb[0].mxu0 %v1187
  %v1382 = vpop.f32.mrb[0].mxu0
  %v1383 = vadd.f32 %v1062, %v1382
  %v1384 = vpop.f32.mrb[0].mxu0
  %1385 = vmatprep.mubr.f32.mxu0 0.0
  %1386 = vmatmul.mubr.f32.gmra.mrb[0].mxu0 %v1190
  %v1387 = vpop.f32.mrb[0].mxu0
  %v1388 = vadd.f32 %v1067, %v1387
  %v1389 = vpop.f32.mrb[0].mxu0
  %1390 = vmatprep.mubr.f32.mxu0 0.0
  %1391 = vmatmul.mubr.f32.gmra.mrb[0].mxu0 %v1193
  %v1392 = vpop.f32.mrb[0].mxu0
  %v1393 = vadd.f32 %v1072, %v1392
  %v1394 = vpop.f32.mrb[0].mxu0
  %1395 = vmatprep.mubr.f32.mxu0 0.0
  %1396 = vmatmul.mubr.f32.gmra.mrb[0].mxu0 %v1196
  %v1397 = vpop.f32.mrb[0].mxu0
  %v1398 = vadd.f32 %v1077, %v1397
  %v1399 = vpop.f32.mrb[0].mxu0
  %1400 = vmatprep.mubr.f32.mxu0 0.0
  %1401 = vmatmul.mubr.f32.gmra.mrb[0].mxu0 %v1199
  %v1402 = vpop.f32.mrb[0].mxu0
  %v1403 = vadd.f32 %v1082, %v1402
  %v1404 = vpop.f32.mrb[0].mxu0
  %1405 = vmatprep.mubr.f32.mxu0 0.0
  %1406 = vmatmul.mubr.f32.gmra.mrb[0].mxu0 %v1202
  %v1407 = vpop.f32.mrb[0].mxu0
  %v1408 = vadd.f32 %v1087, %v1407
  %v1409 = vpop.f32.mrb[0].mxu0
  %1410 = vmatprep.mubr.f32.mxu0 0.0
  %1411 = vmatmul.mubr.f32.gmra.mrb[0].mxu0 %v1205
  %v1412 = vpop.f32.mrb[0].mxu0
  %v1413 = vadd.f32 %v1092, %v1412
  %v1414 = vpop.f32.mrb[0].mxu0
  %1415 = vmatprep.mubr.f32.mxu0 0.0
  %1416 = vmatmul.mubr.f32.gmra.mrb[0].mxu0 %v1208
  %v1417 = vpop.f32.mrb[0].mxu0
  %v1418 = vadd.f32 %v1097, %v1417
  %v1419 = vpop.f32.mrb[0].mxu0
  %1420 = vmatprep.mubr.f32.mxu0 0.0
  %1421 = vmatmul.mubr.f32.gmra.mrb[0].mxu0 %v1211
  %v1422 = vpop.f32.mrb[0].mxu0
  %v1423 = vadd.f32 %v1102, %v1422
  %v1424 = vpop.f32.mrb[0].mxu0
  %1425 = vmatprep.mubr.f32.mxu0 0.0
  %1426 = vmatmul.mubr.f32.gmra.mrb[0].mxu0 %v1214
  %v1427 = vpop.f32.mrb[0].mxu0
  %v1428 = vadd.f32 %v1107, %v1427
  %v1429 = vpop.f32.mrb[0].mxu0
  %1430 = vmatprep.mubr.f32.mxu0 0.0
  %1431 = vmatmul.mubr.f32.gmra.mrb[0].mxu0 %v1217
  %v1432 = vpop.f32.mrb[0].mxu0
  %v1433 = vadd.f32 %v1112, %v1432
  %v1434 = vpop.f32.mrb[0].mxu0
  %1435 = vmatprep.mubr.f32.mxu0 0.0
  %1436 = vmatmul.mubr.f32.gmra.mrb[0].mxu0 %v1220
  %v1437 = vpop.f32.mrb[0].mxu0
  %v1438 = vadd.f32 %v1117, %v1437
  %v1439 = vpop.f32.mrb[0].mxu0
  %1440 = vmatprep.mubr.f32.mxu0 0.0
  %1441 = vmatmul.mubr.f32.gmra.mrb[0].mxu0 %v1223
  %v1442 = vpop.f32.mrb[0].mxu0
  %v1443 = vadd.f32 %v1122, %v1442
  %v1444 = vpop.f32.mrb[0].mxu0
  %1445 = vmatprep.mubr.f32.mxu0 0.0
  %1446 = vmatmul.mubr.f32.gmra.mrb[0].mxu0 %v1226
  %v1447 = vpop.f32.mrb[0].mxu0
  %v1448 = vadd.f32 %v1127, %v1447
  %v1449 = vpop.f32.mrb[0].mxu0
  %1450 = vmatprep.mubr.f32.mxu0 0.0
  %1451 = vmatmul.mubr.f32.gmra.mrb[0].mxu0 %v1229
  %v1452 = vpop.f32.mrb[0].mxu0
  %v1453 = vadd.f32 %v1132, %v1452
  %v1454 = vpop.f32.mrb[0].mxu0
  %1455 = vdwg.mxu0
  %v1456 = vlaneseq
  %v1457 = vshrl.u32 %v1456, 7
  %v1458 = vsub.s32 0, %v1457
  %v1459 = vrot.slane %v100, %v1458
  %v1460 = vadd.f32 %v1298, %v1459
  %v1461 = vadd.f32 %v1303, %v1459
  %v1462 = vadd.f32 %v1308, %v1459
  %v1463 = vadd.f32 %v1313, %v1459
  %v1464 = vadd.f32 %v1318, %v1459
  %v1465 = vadd.f32 %v1323, %v1459
  %v1466 = vadd.f32 %v1328, %v1459
  %v1467 = vadd.f32 %v1333, %v1459
  %v1468 = vadd.f32 %v1338, %v1459
  %v1469 = vadd.f32 %v1343, %v1459
  %v1470 = vadd.f32 %v1348, %v1459
  %v1471 = vadd.f32 %v1353, %v1459
  %v1472 = vadd.f32 %v1358, %v1459
  %v1473 = vadd.f32 %v1363, %v1459
  %v1474 = vadd.f32 %v1368, %v1459
  %v1475 = vadd.f32 %v1373, %v1459
  %v1476 = vadd.f32 %v1378, %v1459
  %v1477 = vadd.f32 %v1383, %v1459
  %v1478 = vadd.f32 %v1388, %v1459
  %v1479 = vadd.f32 %v1393, %v1459
  %v1480 = vadd.f32 %v1398, %v1459
  %v1481 = vadd.f32 %v1403, %v1459
  %v1482 = vadd.f32 %v1408, %v1459
  %v1483 = vadd.f32 %v1413, %v1459
  %v1484 = vadd.f32 %v1418, %v1459
  %v1485 = vadd.f32 %v1423, %v1459
  %v1486 = vadd.f32 %v1428, %v1459
  %v1487 = vadd.f32 %v1433, %v1459
  %v1488 = vadd.f32 %v1438, %v1459
  %v1489 = vadd.f32 %v1443, %v1459
  %v1490 = vadd.f32 %v1448, %v1459
  %v1491 = vadd.f32 %v1453, %v1459
  %v1492 = vmax.f32 %v1460, 0.0
  %v1493 = vmax.f32 %v1461, 0.0
  %v1494 = vmax.f32 %v1462, 0.0
  %v1495 = vmax.f32 %v1463, 0.0
  %v1496 = vmax.f32 %v1464, 0.0
  %v1497 = vmax.f32 %v1465, 0.0
  %v1498 = vmax.f32 %v1466, 0.0
  %v1499 = vmax.f32 %v1467, 0.0
  %v1500 = vmax.f32 %v1468, 0.0
  %v1501 = vmax.f32 %v1469, 0.0
  %v1502 = vmax.f32 %v1470, 0.0
  %v1503 = vmax.f32 %v1471, 0.0
  %v1504 = vmax.f32 %v1472, 0.0
  %v1505 = vmax.f32 %v1473, 0.0
  %v1506 = vmax.f32 %v1474, 0.0
  %v1507 = vmax.f32 %v1475, 0.0
  %v1508 = vmax.f32 %v1476, 0.0
  %v1509 = vmax.f32 %v1477, 0.0
  %v1510 = vmax.f32 %v1478, 0.0
  %v1511 = vmax.f32 %v1479, 0.0
  %v1512 = vmax.f32 %v1480, 0.0
  %v1513 = vmax.f32 %v1481, 0.0
  %v1514 = vmax.f32 %v1482, 0.0
  %v1515 = vmax.f32 %v1483, 0.0
  %v1516 = vmax.f32 %v1484, 0.0
  %v1517 = vmax.f32 %v1485, 0.0
  %v1518 = vmax.f32 %v1486, 0.0
  %v1519 = vmax.f32 %v1487, 0.0
  %v1520 = vmax.f32 %v1488, 0.0
  %v1521 = vmax.f32 %v1489, 0.0
  %v1522 = vmax.f32 %v1490, 0.0
  %v1523 = vmax.f32 %v1491, 0.0
  %vm1524 = vcmask 523264
  %v1525 = vsel %vm1524, %v1492, 0.0
  %1526 = vadd.xlane.f32.xlu0 %v1525
  %v1527 = vpop.xlane.xlu0 %1526
  %v1528 = vsel %vm1524, %v1493, 0.0
  %1529 = vadd.xlane.f32.xlu0 %v1528
  %v1530 = vpop.xlane.xlu0 %1529
  %v1531 = vsel %vm1524, %v1494, 0.0
  %1532 = vadd.xlane.f32.xlu0 %v1531
  %v1533 = vpop.xlane.xlu0 %1532
  %v1534 = vsel %vm1524, %v1495, 0.0
  %1535 = vadd.xlane.f32.xlu0 %v1534
  %v1536 = vpop.xlane.xlu0 %1535
  %v1537 = vsel %vm1524, %v1496, 0.0
  %1538 = vadd.xlane.f32.xlu0 %v1537
  %v1539 = vpop.xlane.xlu0 %1538
  %v1540 = vsel %vm1524, %v1497, 0.0
  %1541 = vadd.xlane.f32.xlu0 %v1540
  %v1542 = vpop.xlane.xlu0 %1541
  %v1543 = vsel %vm1524, %v1498, 0.0
  %1544 = vadd.xlane.f32.xlu0 %v1543
  %v1545 = vpop.xlane.xlu0 %1544
  %v1546 = vsel %vm1524, %v1499, 0.0
  %1547 = vadd.xlane.f32.xlu0 %v1546
  %v1548 = vpop.xlane.xlu0 %1547
  %v1549 = vsel %vm1524, %v1500, 0.0
  %1550 = vadd.xlane.f32.xlu0 %v1549
  %v1551 = vpop.xlane.xlu0 %1550
  %v1552 = vsel %vm1524, %v1501, 0.0
  %1553 = vadd.xlane.f32.xlu0 %v1552
  %v1554 = vpop.xlane.xlu0 %1553
  %v1555 = vsel %vm1524, %v1502, 0.0
  %1556 = vadd.xlane.f32.xlu0 %v1555
  %v1557 = vpop.xlane.xlu0 %1556
  %v1558 = vsel %vm1524, %v1503, 0.0
  %1559 = vadd.xlane.f32.xlu0 %v1558
  %v1560 = vpop.xlane.xlu0 %1559
  %v1561 = vsel %vm1524, %v1504, 0.0
  %1562 = vadd.xlane.f32.xlu0 %v1561
  %v1563 = vpop.xlane.xlu0 %1562
  %v1564 = vsel %vm1524, %v1505, 0.0
  %1565 = vadd.xlane.f32.xlu0 %v1564
  %v1566 = vpop.xlane.xlu0 %1565
  %v1567 = vsel %vm1524, %v1506, 0.0
  %1568 = vadd.xlane.f32.xlu0 %v1567
  %v1569 = vpop.xlane.xlu0 %1568
  %v1570 = vsel %vm1524, %v1507, 0.0
  %1571 = vadd.xlane.f32.xlu0 %v1570
  %v1572 = vpop.xlane.xlu0 %1571
  %v1573 = vsel %vm1524, %v1508, 0.0
  %1574 = vadd.xlane.f32.xlu0 %v1573
  %v1575 = vpop.xlane.xlu0 %1574
  %v1576 = vsel %vm1524, %v1509, 0.0
  %1577 = vadd.xlane.f32.xlu0 %v1576
  %v1578 = vpop.xlane.xlu0 %1577
  %v1579 = vsel %vm1524, %v1510, 0.0
  %1580 = vadd.xlane.f32.xlu0 %v1579
  %v1581 = vpop.xlane.xlu0 %1580
  %v1582 = vsel %vm1524, %v1511, 0.0
  %1583 = vadd.xlane.f32.xlu0 %v1582
  %v1584 = vpop.xlane.xlu0 %1583
  %v1585 = vsel %vm1524, %v1512, 0.0
  %1586 = vadd.xlane.f32.xlu0 %v1585
  %v1587 = vpop.xlane.xlu0 %1586
  %v1588 = vsel %vm1524, %v1513, 0.0
  %1589 = vadd.xlane.f32.xlu0 %v1588
  %v1590 = vpop.xlane.xlu0 %1589
  %v1591 = vsel %vm1524, %v1514, 0.0
  %1592 = vadd.xlane.f32.xlu0 %v1591
  %v1593 = vpop.xlane.xlu0 %1592
  %v1594 = vsel %vm1524, %v1515, 0.0
  %1595 = vadd.xlane.f32.xlu0 %v1594
  %v1596 = vpop.xlane.xlu0 %1595
  %v1597 = vsel %vm1524, %v1516, 0.0
  %1598 = vadd.xlane.f32.xlu0 %v1597
  %v1599 = vpop.xlane.xlu0 %1598
  %v1600 = vsel %vm1524, %v1517, 0.0
  %1601 = vadd.xlane.f32.xlu0 %v1600
  %v1602 = vpop.xlane.xlu0 %1601
  %v1603 = vsel %vm1524, %v1518, 0.0
  %1604 = vadd.xlane.f32.xlu0 %v1603
  %v1605 = vpop.xlane.xlu0 %1604
  %v1606 = vsel %vm1524, %v1519, 0.0
  %1607 = vadd.xlane.f32.xlu0 %v1606
  %v1608 = vpop.xlane.xlu0 %1607
  %v1609 = vsel %vm1524, %v1520, 0.0
  %1610 = vadd.xlane.f32.xlu0 %v1609
  %v1611 = vpop.xlane.xlu0 %1610
  %v1612 = vsel %vm1524, %v1521, 0.0
  %1613 = vadd.xlane.f32.xlu0 %v1612
  %v1614 = vpop.xlane.xlu0 %1613
  %v1615 = vsel %vm1524, %v1522, 0.0
  %1616 = vadd.xlane.f32.xlu0 %v1615
  %v1617 = vpop.xlane.xlu0 %1616
  %v1618 = vsel %vm1524, %v1523, 0.0
  %1619 = vadd.xlane.f32.xlu0 %v1618
  %v1620 = vpop.xlane.xlu0 %1619
  %v1621 = vrcp.pop 64.0
  %v1622 = vmul.f32 %v1527, %v1621
  %v1623 = vmul.f32 %v1530, %v1621
  %v1624 = vmul.f32 %v1533, %v1621
  %v1625 = vmul.f32 %v1536, %v1621
  %v1626 = vmul.f32 %v1539, %v1621
  %v1627 = vmul.f32 %v1542, %v1621
  %v1628 = vmul.f32 %v1545, %v1621
  %v1629 = vmul.f32 %v1548, %v1621
  %v1630 = vmul.f32 %v1551, %v1621
  %v1631 = vmul.f32 %v1554, %v1621
  %v1632 = vmul.f32 %v1557, %v1621
  %v1633 = vmul.f32 %v1560, %v1621
  %v1634 = vmul.f32 %v1563, %v1621
  %v1635 = vmul.f32 %v1566, %v1621
  %v1636 = vmul.f32 %v1569, %v1621
  %v1637 = vmul.f32 %v1572, %v1621
  %v1638 = vmul.f32 %v1575, %v1621
  %v1639 = vmul.f32 %v1578, %v1621
  %v1640 = vmul.f32 %v1581, %v1621
  %v1641 = vmul.f32 %v1584, %v1621
  %v1642 = vmul.f32 %v1587, %v1621
  %v1643 = vmul.f32 %v1590, %v1621
  %v1644 = vmul.f32 %v1593, %v1621
  %v1645 = vmul.f32 %v1596, %v1621
  %v1646 = vmul.f32 %v1599, %v1621
  %v1647 = vmul.f32 %v1602, %v1621
  %v1648 = vmul.f32 %v1605, %v1621
  %v1649 = vmul.f32 %v1608, %v1621
  %v1650 = vmul.f32 %v1611, %v1621
  %v1651 = vmul.f32 %v1614, %v1621
  %v1652 = vmul.f32 %v1617, %v1621
  %v1653 = vmul.f32 %v1620, %v1621
  %v1654 = vsub.f32 %v1492, %v1622
  %v1655 = vsub.f32 %v1493, %v1623
  %v1656 = vsub.f32 %v1494, %v1624
  %v1657 = vsub.f32 %v1495, %v1625
  %v1658 = vsub.f32 %v1496, %v1626
  %v1659 = vsub.f32 %v1497, %v1627
  %v1660 = vsub.f32 %v1498, %v1628
  %v1661 = vsub.f32 %v1499, %v1629
  %v1662 = vsub.f32 %v1500, %v1630
  %v1663 = vsub.f32 %v1501, %v1631
  %v1664 = vsub.f32 %v1502, %v1632
  %v1665 = vsub.f32 %v1503, %v1633
  %v1666 = vsub.f32 %v1504, %v1634
  %v1667 = vsub.f32 %v1505, %v1635
  %v1668 = vsub.f32 %v1506, %v1636
  %v1669 = vsub.f32 %v1507, %v1637
  %v1670 = vsub.f32 %v1508, %v1638
  %v1671 = vsub.f32 %v1509, %v1639
  %v1672 = vsub.f32 %v1510, %v1640
  %v1673 = vsub.f32 %v1511, %v1641
  %v1674 = vsub.f32 %v1512, %v1642
  %v1675 = vsub.f32 %v1513, %v1643
  %v1676 = vsub.f32 %v1514, %v1644
  %v1677 = vsub.f32 %v1515, %v1645
  %v1678 = vsub.f32 %v1516, %v1646
  %v1679 = vsub.f32 %v1517, %v1647
  %v1680 = vsub.f32 %v1518, %v1648
  %v1681 = vsub.f32 %v1519, %v1649
  %v1682 = vsub.f32 %v1520, %v1650
  %v1683 = vsub.f32 %v1521, %v1651
  %v1684 = vsub.f32 %v1522, %v1652
  %v1685 = vsub.f32 %v1523, %v1653
  %v1686 = vmul.f32 %v1654, %v1654
  %v1687 = vmul.f32 %v1655, %v1655
  %v1688 = vmul.f32 %v1656, %v1656
  %v1689 = vmul.f32 %v1657, %v1657
  %v1690 = vmul.f32 %v1658, %v1658
  %v1691 = vmul.f32 %v1659, %v1659
  %v1692 = vmul.f32 %v1660, %v1660
  %v1693 = vmul.f32 %v1661, %v1661
  %v1694 = vmul.f32 %v1662, %v1662
  %v1695 = vmul.f32 %v1663, %v1663
  %v1696 = vmul.f32 %v1664, %v1664
  %v1697 = vmul.f32 %v1665, %v1665
  %v1698 = vmul.f32 %v1666, %v1666
  %v1699 = vmul.f32 %v1667, %v1667
  %v1700 = vmul.f32 %v1668, %v1668
  %v1701 = vmul.f32 %v1669, %v1669
  %v1702 = vmul.f32 %v1670, %v1670
  %v1703 = vmul.f32 %v1671, %v1671
  %v1704 = vmul.f32 %v1672, %v1672
  %v1705 = vmul.f32 %v1673, %v1673
  %v1706 = vmul.f32 %v1674, %v1674
  %v1707 = vmul.f32 %v1675, %v1675
  %v1708 = vmul.f32 %v1676, %v1676
  %v1709 = vmul.f32 %v1677, %v1677
  %v1710 = vmul.f32 %v1678, %v1678
  %v1711 = vmul.f32 %v1679, %v1679
  %v1712 = vmul.f32 %v1680, %v1680
  %v1713 = vmul.f32 %v1681, %v1681
  %v1714 = vmul.f32 %v1682, %v1682
  %v1715 = vmul.f32 %v1683, %v1683
  %v1716 = vmul.f32 %v1684, %v1684
  %v1717 = vmul.f32 %v1685, %v1685
  %v1718 = vsel %vm1524, %v1686, 0.0
  %1719 = vadd.xlane.f32.xlu0 %v1718
  %v1720 = vpop.xlane.xlu0 %1719
  %v1721 = vsel %vm1524, %v1687, 0.0
  %1722 = vadd.xlane.f32.xlu0 %v1721
  %v1723 = vpop.xlane.xlu0 %1722
  %v1724 = vsel %vm1524, %v1688, 0.0
  %1725 = vadd.xlane.f32.xlu0 %v1724
  %v1726 = vpop.xlane.xlu0 %1725
  %v1727 = vsel %vm1524, %v1689, 0.0
  %1728 = vadd.xlane.f32.xlu0 %v1727
  %v1729 = vpop.xlane.xlu0 %1728
  %v1730 = vsel %vm1524, %v1690, 0.0
  %1731 = vadd.xlane.f32.xlu0 %v1730
  %v1732 = vpop.xlane.xlu0 %1731
  %v1733 = vsel %vm1524, %v1691, 0.0
  %1734 = vadd.xlane.f32.xlu0 %v1733
  %v1735 = vpop.xlane.xlu0 %1734
  %v1736 = vsel %vm1524, %v1692, 0.0
  %1737 = vadd.xlane.f32.xlu0 %v1736
  %v1738 = vpop.xlane.xlu0 %1737
  %v1739 = vsel %vm1524, %v1693, 0.0
  %1740 = vadd.xlane.f32.xlu0 %v1739
  %v1741 = vpop.xlane.xlu0 %1740
  %v1742 = vsel %vm1524, %v1694, 0.0
  %1743 = vadd.xlane.f32.xlu0 %v1742
  %v1744 = vpop.xlane.xlu0 %1743
  %v1745 = vsel %vm1524, %v1695, 0.0
  %1746 = vadd.xlane.f32.xlu0 %v1745
  %v1747 = vpop.xlane.xlu0 %1746
  %v1748 = vsel %vm1524, %v1696, 0.0
  %1749 = vadd.xlane.f32.xlu0 %v1748
  %v1750 = vpop.xlane.xlu0 %1749
  %v1751 = vsel %vm1524, %v1697, 0.0
  %1752 = vadd.xlane.f32.xlu0 %v1751
  %v1753 = vpop.xlane.xlu0 %1752
  %v1754 = vsel %vm1524, %v1698, 0.0
  %1755 = vadd.xlane.f32.xlu0 %v1754
  %v1756 = vpop.xlane.xlu0 %1755
  %v1757 = vsel %vm1524, %v1699, 0.0
  %1758 = vadd.xlane.f32.xlu0 %v1757
  %v1759 = vpop.xlane.xlu0 %1758
  %v1760 = vsel %vm1524, %v1700, 0.0
  %1761 = vadd.xlane.f32.xlu0 %v1760
  %v1762 = vpop.xlane.xlu0 %1761
  %v1763 = vsel %vm1524, %v1701, 0.0
  %1764 = vadd.xlane.f32.xlu0 %v1763
  %v1765 = vpop.xlane.xlu0 %1764
  %v1766 = vsel %vm1524, %v1702, 0.0
  %1767 = vadd.xlane.f32.xlu0 %v1766
  %v1768 = vpop.xlane.xlu0 %1767
  %v1769 = vsel %vm1524, %v1703, 0.0
  %1770 = vadd.xlane.f32.xlu0 %v1769
  %v1771 = vpop.xlane.xlu0 %1770
  %v1772 = vsel %vm1524, %v1704, 0.0
  %1773 = vadd.xlane.f32.xlu0 %v1772
  %v1774 = vpop.xlane.xlu0 %1773
  %v1775 = vsel %vm1524, %v1705, 0.0
  %1776 = vadd.xlane.f32.xlu0 %v1775
  %v1777 = vpop.xlane.xlu0 %1776
  %v1778 = vsel %vm1524, %v1706, 0.0
  %1779 = vadd.xlane.f32.xlu0 %v1778
  %v1780 = vpop.xlane.xlu0 %1779
  %v1781 = vsel %vm1524, %v1707, 0.0
  %1782 = vadd.xlane.f32.xlu0 %v1781
  %v1783 = vpop.xlane.xlu0 %1782
  %v1784 = vsel %vm1524, %v1708, 0.0
  %1785 = vadd.xlane.f32.xlu0 %v1784
  %v1786 = vpop.xlane.xlu0 %1785
  %v1787 = vsel %vm1524, %v1709, 0.0
  %1788 = vadd.xlane.f32.xlu0 %v1787
  %v1789 = vpop.xlane.xlu0 %1788
  %v1790 = vsel %vm1524, %v1710, 0.0
  %1791 = vadd.xlane.f32.xlu0 %v1790
  %v1792 = vpop.xlane.xlu0 %1791
  %v1793 = vsel %vm1524, %v1711, 0.0
  %1794 = vadd.xlane.f32.xlu0 %v1793
  %v1795 = vpop.xlane.xlu0 %1794
  %v1796 = vsel %vm1524, %v1712, 0.0
  %1797 = vadd.xlane.f32.xlu0 %v1796
  %v1798 = vpop.xlane.xlu0 %1797
  %v1799 = vsel %vm1524, %v1713, 0.0
  %1800 = vadd.xlane.f32.xlu0 %v1799
  %v1801 = vpop.xlane.xlu0 %1800
  %v1802 = vsel %vm1524, %v1714, 0.0
  %1803 = vadd.xlane.f32.xlu0 %v1802
  %v1804 = vpop.xlane.xlu0 %1803
  %v1805 = vsel %vm1524, %v1715, 0.0
  %1806 = vadd.xlane.f32.xlu0 %v1805
  %v1807 = vpop.xlane.xlu0 %1806
  %v1808 = vsel %vm1524, %v1716, 0.0
  %1809 = vadd.xlane.f32.xlu0 %v1808
  %v1810 = vpop.xlane.xlu0 %1809
  %v1811 = vsel %vm1524, %v1717, 0.0
  %1812 = vadd.xlane.f32.xlu0 %v1811
  %v1813 = vpop.xlane.xlu0 %1812
  %v1814 = vmul.f32 %v1720, %v1621
  %v1815 = vmul.f32 %v1723, %v1621
  %v1816 = vmul.f32 %v1726, %v1621
  %v1817 = vmul.f32 %v1729, %v1621
  %v1818 = vmul.f32 %v1732, %v1621
  %v1819 = vmul.f32 %v1735, %v1621
  %v1820 = vmul.f32 %v1738, %v1621
  %v1821 = vmul.f32 %v1741, %v1621
  %v1822 = vmul.f32 %v1744, %v1621
  %v1823 = vmul.f32 %v1747, %v1621
  %v1824 = vmul.f32 %v1750, %v1621
  %v1825 = vmul.f32 %v1753, %v1621
  %v1826 = vmul.f32 %v1756, %v1621
  %v1827 = vmul.f32 %v1759, %v1621
  %v1828 = vmul.f32 %v1762, %v1621
  %v1829 = vmul.f32 %v1765, %v1621
  %v1830 = vmul.f32 %v1768, %v1621
  %v1831 = vmul.f32 %v1771, %v1621
  %v1832 = vmul.f32 %v1774, %v1621
  %v1833 = vmul.f32 %v1777, %v1621
  %v1834 = vmul.f32 %v1780, %v1621
  %v1835 = vmul.f32 %v1783, %v1621
  %v1836 = vmul.f32 %v1786, %v1621
  %v1837 = vmul.f32 %v1789, %v1621
  %v1838 = vmul.f32 %v1792, %v1621
  %v1839 = vmul.f32 %v1795, %v1621
  %v1840 = vmul.f32 %v1798, %v1621
  %v1841 = vmul.f32 %v1801, %v1621
  %v1842 = vmul.f32 %v1804, %v1621
  %v1843 = vmul.f32 %v1807, %v1621
  %v1844 = vmul.f32 %v1810, %v1621
  %v1845 = vmul.f32 %v1813, %v1621
  %v1846 = vadd.f32 %v1814, 1e-05
  %v1847 = vadd.f32 %v1815, 1e-05
  %v1848 = vadd.f32 %v1816, 1e-05
  %v1849 = vadd.f32 %v1817, 1e-05
  %v1850 = vadd.f32 %v1818, 1e-05
  %v1851 = vadd.f32 %v1819, 1e-05
  %v1852 = vadd.f32 %v1820, 1e-05
  %v1853 = vadd.f32 %v1821, 1e-05
  %v1854 = vadd.f32 %v1822, 1e-05
  %v1855 = vadd.f32 %v1823, 1e-05
  %v1856 = vadd.f32 %v1824, 1e-05
  %v1857 = vadd.f32 %v1825, 1e-05
  %v1858 = vadd.f32 %v1826, 1e-05
  %v1859 = vadd.f32 %v1827, 1e-05
  %v1860 = vadd.f32 %v1828, 1e-05
  %v1861 = vadd.f32 %v1829, 1e-05
  %v1862 = vadd.f32 %v1830, 1e-05
  %v1863 = vadd.f32 %v1831, 1e-05
  %v1864 = vadd.f32 %v1832, 1e-05
  %v1865 = vadd.f32 %v1833, 1e-05
  %v1866 = vadd.f32 %v1834, 1e-05
  %v1867 = vadd.f32 %v1835, 1e-05
  %v1868 = vadd.f32 %v1836, 1e-05
  %v1869 = vadd.f32 %v1837, 1e-05
  %v1870 = vadd.f32 %v1838, 1e-05
  %v1871 = vadd.f32 %v1839, 1e-05
  %v1872 = vadd.f32 %v1840, 1e-05
  %v1873 = vadd.f32 %v1841, 1e-05
  %v1874 = vadd.f32 %v1842, 1e-05
  %v1875 = vadd.f32 %v1843, 1e-05
  %v1876 = vadd.f32 %v1844, 1e-05
  %v1877 = vadd.f32 %v1845, 1e-05
  %v1878 = vrsqrt.pop %v1846
  %v1879 = vrsqrt.pop %v1847
  %v1880 = vrsqrt.pop %v1848
  %v1881 = vrsqrt.pop %v1849
  %v1882 = vrsqrt.pop %v1850
  %v1883 = vrsqrt.pop %v1851
  %v1884 = vrsqrt.pop %v1852
  %v1885 = vrsqrt.pop %v1853
  %v1886 = vrsqrt.pop %v1854
  %v1887 = vrsqrt.pop %v1855
  %v1888 = vrsqrt.pop %v1856
  %v1889 = vrsqrt.pop %v1857
  %v1890 = vrsqrt.pop %v1858
  %v1891 = vrsqrt.pop %v1859
  %v1892 = vrsqrt.pop %v1860
  %v1893 = vrsqrt.pop %v1861
  %v1894 = vrsqrt.pop %v1862
  %v1895 = vrsqrt.pop %v1863
  %v1896 = vrsqrt.pop %v1864
  %v1897 = vrsqrt.pop %v1865
  %v1898 = vrsqrt.pop %v1866
  %v1899 = vrsqrt.pop %v1867
  %v1900 = vrsqrt.pop %v1868
  %v1901 = vrsqrt.pop %v1869
  %v1902 = vrsqrt.pop %v1870
  %v1903 = vrsqrt.pop %v1871
  %v1904 = vrsqrt.pop %v1872
  %v1905 = vrsqrt.pop %v1873
  %v1906 = vrsqrt.pop %v1874
  %v1907 = vrsqrt.pop %v1875
  %v1908 = vrsqrt.pop %v1876
  %v1909 = vrsqrt.pop %v1877
  %v1910 = vmul.f32 %v1654, %v1878
  %v1911 = vmul.f32 %v1655, %v1879
  %v1912 = vmul.f32 %v1656, %v1880
  %v1913 = vmul.f32 %v1657, %v1881
  %v1914 = vmul.f32 %v1658, %v1882
  %v1915 = vmul.f32 %v1659, %v1883
  %v1916 = vmul.f32 %v1660, %v1884
  %v1917 = vmul.f32 %v1661, %v1885
  %v1918 = vmul.f32 %v1662, %v1886
  %v1919 = vmul.f32 %v1663, %v1887
  %v1920 = vmul.f32 %v1664, %v1888
  %v1921 = vmul.f32 %v1665, %v1889
  %v1922 = vmul.f32 %v1666, %v1890
  %v1923 = vmul.f32 %v1667, %v1891
  %v1924 = vmul.f32 %v1668, %v1892
  %v1925 = vmul.f32 %v1669, %v1893
  %v1926 = vmul.f32 %v1670, %v1894
  %v1927 = vmul.f32 %v1671, %v1895
  %v1928 = vmul.f32 %v1672, %v1896
  %v1929 = vmul.f32 %v1673, %v1897
  %v1930 = vmul.f32 %v1674, %v1898
  %v1931 = vmul.f32 %v1675, %v1899
  %v1932 = vmul.f32 %v1676, %v1900
  %v1933 = vmul.f32 %v1677, %v1901
  %v1934 = vmul.f32 %v1678, %v1902
  %v1935 = vmul.f32 %v1679, %v1903
  %v1936 = vmul.f32 %v1680, %v1904
  %v1937 = vmul.f32 %v1681, %v1905
  %v1938 = vmul.f32 %v1682, %v1906
  %v1939 = vmul.f32 %v1683, %v1907
  %v1940 = vmul.f32 %v1684, %v1908
  %v1941 = vmul.f32 %v1685, %v1909
  %v1942 = vlaneseq
  %v1943 = vshrl.u32 %v1942, 7
  %v1944 = vsub.s32 0, %v1943
  %v1945 = vrot.slane %v101, %v1944
  %v1947 = vsel %vm1524, %v1910, 0
  %v1950 = vsel %vm1524, %v1911, 0
  %v1953 = vsel %vm1524, %v1912, 0
  %v1956 = vsel %vm1524, %v1913, 0
  %v1959 = vsel %vm1524, %v1914, 0
  %v1962 = vsel %vm1524, %v1915, 0
  %v1965 = vsel %vm1524, %v1916, 0
  %v1968 = vsel %vm1524, %v1917, 0
  %v1971 = vsel %vm1524, %v1918, 0
  %v1974 = vsel %vm1524, %v1919, 0
  %v1977 = vsel %vm1524, %v1920, 0
  %v1980 = vsel %vm1524, %v1921, 0
  %v1983 = vsel %vm1524, %v1922, 0
  %v1986 = vsel %vm1524, %v1923, 0
  %v1989 = vsel %vm1524, %v1924, 0
  %v1992 = vsel %vm1524, %v1925, 0
  %v1995 = vsel %vm1524, %v1926, 0
  %v1998 = vsel %vm1524, %v1927, 0
  %v2001 = vsel %vm1524, %v1928, 0
  %v2004 = vsel %vm1524, %v1929, 0
  %v2007 = vsel %vm1524, %v1930, 0
  %v2010 = vsel %vm1524, %v1931, 0
  %v2013 = vsel %vm1524, %v1932, 0
  %v2016 = vsel %vm1524, %v1933, 0
  %v2019 = vsel %vm1524, %v1934, 0
  %v2022 = vsel %vm1524, %v1935, 0
  %v2025 = vsel %vm1524, %v1936, 0
  %v2028 = vsel %vm1524, %v1937, 0
  %v2031 = vsel %vm1524, %v1938, 0
  %v2034 = vsel %vm1524, %v1939, 0
  %v2037 = vsel %vm1524, %v1940, 0
  %v2040 = vsel %vm1524, %v1941, 0
  %2042 = vmatprep.subr.mxu0 0.0
  %2043 = vmatpush1.msra.mxu0 %v91
  %2044 = vmatprep.subr.mxu0 0.0
  %2045 = vmatpush1.msra.mxu0 %v92
  %2046 = vmatprep.subr.mxu0 0.0
  %2047 = vmatpush1.msra.mxu0 %v93
  %2048 = vmatprep.subr.mxu0 0.0
  %2049 = vmatpush1.msra.mxu0 %v94
  %2050 = vmatprep.subr.mxu0 0.0
  %2051 = vmatpush1.msra.mxu0 %v95
  %2052 = vmatprep.subr.mxu0 0.0
  %2053 = vmatpush1.msra.mxu0 %v96
  %2054 = vmatprep.subr.mxu0 0.0
  %2055 = vmatpush1.msra.mxu0 %v97
  %2056 = vmatprep.subr.mxu0 0.0
  %2057 = vmatpush1.msra.mxu0 %v98
  %2058 = vmatprep.subr.mxu0 0.0
  %2059 = vmatpush1.msra.mxu0 0.0
  %2060 = vmatprep.subr.mxu0 0.0
  %2061 = vmatpush1.msra.mxu0 0.0
  %2062 = vmatprep.subr.mxu0 0.0
  %2063 = vmatpush1.msra.mxu0 0.0
  %2064 = vmatprep.subr.mxu0 0.0
  %2065 = vmatpush1.msra.mxu0 0.0
  %2066 = vmatprep.subr.mxu0 0.0
  %2067 = vmatpush1.msra.mxu0 0.0
  %2068 = vmatprep.subr.mxu0 0.0
  %2069 = vmatpush1.msra.mxu0 0.0
  %2070 = vmatprep.subr.mxu0 0.0
  %2071 = vmatpush1.msra.mxu0 0.0
  %2072 = vmatprep.subr.mxu0 0.0
  %2073 = vmatpush1.msra.mxu0 0.0
  %2074 = vmatprep.subr.mxu0 0.0
  %2075 = vmatpush1.msra.mxu0 0.0
  %2076 = vmatprep.subr.mxu0 0.0
  %2077 = vmatpush1.msra.mxu0 0.0
  %2078 = vmatprep.subr.mxu0 0.0
  %2079 = vmatpush1.msra.mxu0 0.0
  %2080 = vmatprep.subr.mxu0 0.0
  %2081 = vmatpush1.msra.mxu0 0.0
  %2082 = vmatprep.subr.mxu0 0.0
  %2083 = vmatpush1.msra.mxu0 0.0
  %2084 = vmatprep.subr.mxu0 0.0
  %2085 = vmatpush1.msra.mxu0 0.0
  %2086 = vmatprep.subr.mxu0 0.0
  %2087 = vmatpush1.msra.mxu0 0.0
  %2088 = vmatprep.subr.mxu0 0.0
  %2089 = vmatpush1.msra.mxu0 0.0
  %2090 = vmatprep.subr.mxu0 0.0
  %2091 = vmatpush1.msra.mxu0 0.0
  %2092 = vmatprep.subr.mxu0 0.0
  %2093 = vmatpush1.msra.mxu0 0.0
  %2094 = vmatprep.subr.mxu0 0.0
  %2095 = vmatpush1.msra.mxu0 0.0
  %2096 = vmatprep.subr.mxu0 0.0
  %2097 = vmatpush1.msra.mxu0 0.0
  %2098 = vmatprep.subr.mxu0 0.0
  %2099 = vmatpush1.msra.mxu0 0.0
  %2100 = vmatprep.subr.mxu0 0.0
  %2101 = vmatpush1.msra.mxu0 0.0
  %2102 = vmatprep.subr.mxu0 0.0
  %2103 = vmatpush1.msra.mxu0 0.0
  %2104 = vmatprep.subr.mxu0 0.0
  %2105 = vmatpush1.msra.mxu0 0.0
  %2106 = vmatprep.mubr.f32.mxu0 0.0
  %2107 = vmatmul.mubr.f32.gmra.mrb[0].mxu0 %v1947
  %v2108 = vpop.f32.mrb[0].mxu0
  %v2109 = vadd.f32 %v1945, %v2108
  %v2110 = vpop.f32.mrb[0].mxu0
  %2111 = vmatprep.mubr.f32.mxu0 0.0
  %2112 = vmatmul.mubr.f32.gmra.mrb[0].mxu0 %v1950
  %v2113 = vpop.f32.mrb[0].mxu0
  %v2114 = vadd.f32 %v1945, %v2113
  %v2115 = vpop.f32.mrb[0].mxu0
  %2116 = vmatprep.mubr.f32.mxu0 0.0
  %2117 = vmatmul.mubr.f32.gmra.mrb[0].mxu0 %v1953
  %v2118 = vpop.f32.mrb[0].mxu0
  %v2119 = vadd.f32 %v1945, %v2118
  %v2120 = vpop.f32.mrb[0].mxu0
  %2121 = vmatprep.mubr.f32.mxu0 0.0
  %2122 = vmatmul.mubr.f32.gmra.mrb[0].mxu0 %v1956
  %v2123 = vpop.f32.mrb[0].mxu0
  %v2124 = vadd.f32 %v1945, %v2123
  %v2125 = vpop.f32.mrb[0].mxu0
  %2126 = vmatprep.mubr.f32.mxu0 0.0
  %2127 = vmatmul.mubr.f32.gmra.mrb[0].mxu0 %v1959
  %v2128 = vpop.f32.mrb[0].mxu0
  %v2129 = vadd.f32 %v1945, %v2128
  %v2130 = vpop.f32.mrb[0].mxu0
  %2131 = vmatprep.mubr.f32.mxu0 0.0
  %2132 = vmatmul.mubr.f32.gmra.mrb[0].mxu0 %v1962
  %v2133 = vpop.f32.mrb[0].mxu0
  %v2134 = vadd.f32 %v1945, %v2133
  %v2135 = vpop.f32.mrb[0].mxu0
  %2136 = vmatprep.mubr.f32.mxu0 0.0
  %2137 = vmatmul.mubr.f32.gmra.mrb[0].mxu0 %v1965
  %v2138 = vpop.f32.mrb[0].mxu0
  %v2139 = vadd.f32 %v1945, %v2138
  %v2140 = vpop.f32.mrb[0].mxu0
  %2141 = vmatprep.mubr.f32.mxu0 0.0
  %2142 = vmatmul.mubr.f32.gmra.mrb[0].mxu0 %v1968
  %v2143 = vpop.f32.mrb[0].mxu0
  %v2144 = vadd.f32 %v1945, %v2143
  %v2145 = vpop.f32.mrb[0].mxu0
  %2146 = vmatprep.mubr.f32.mxu0 0.0
  %2147 = vmatmul.mubr.f32.gmra.mrb[0].mxu0 %v1971
  %v2148 = vpop.f32.mrb[0].mxu0
  %v2149 = vadd.f32 %v1945, %v2148
  %v2150 = vpop.f32.mrb[0].mxu0
  %2151 = vmatprep.mubr.f32.mxu0 0.0
  %2152 = vmatmul.mubr.f32.gmra.mrb[0].mxu0 %v1974
  %v2153 = vpop.f32.mrb[0].mxu0
  %v2154 = vadd.f32 %v1945, %v2153
  %v2155 = vpop.f32.mrb[0].mxu0
  %2156 = vmatprep.mubr.f32.mxu0 0.0
  %2157 = vmatmul.mubr.f32.gmra.mrb[0].mxu0 %v1977
  %v2158 = vpop.f32.mrb[0].mxu0
  %v2159 = vadd.f32 %v1945, %v2158
  %v2160 = vpop.f32.mrb[0].mxu0
  %2161 = vmatprep.mubr.f32.mxu0 0.0
  %2162 = vmatmul.mubr.f32.gmra.mrb[0].mxu0 %v1980
  %v2163 = vpop.f32.mrb[0].mxu0
  %v2164 = vadd.f32 %v1945, %v2163
  %v2165 = vpop.f32.mrb[0].mxu0
  %2166 = vmatprep.mubr.f32.mxu0 0.0
  %2167 = vmatmul.mubr.f32.gmra.mrb[0].mxu0 %v1983
  %v2168 = vpop.f32.mrb[0].mxu0
  %v2169 = vadd.f32 %v1945, %v2168
  %v2170 = vpop.f32.mrb[0].mxu0
  %2171 = vmatprep.mubr.f32.mxu0 0.0
  %2172 = vmatmul.mubr.f32.gmra.mrb[0].mxu0 %v1986
  %v2173 = vpop.f32.mrb[0].mxu0
  %v2174 = vadd.f32 %v1945, %v2173
  %v2175 = vpop.f32.mrb[0].mxu0
  %2176 = vmatprep.mubr.f32.mxu0 0.0
  %2177 = vmatmul.mubr.f32.gmra.mrb[0].mxu0 %v1989
  %v2178 = vpop.f32.mrb[0].mxu0
  %v2179 = vadd.f32 %v1945, %v2178
  %v2180 = vpop.f32.mrb[0].mxu0
  %2181 = vmatprep.mubr.f32.mxu0 0.0
  %2182 = vmatmul.mubr.f32.gmra.mrb[0].mxu0 %v1992
  %v2183 = vpop.f32.mrb[0].mxu0
  %v2184 = vadd.f32 %v1945, %v2183
  %v2185 = vpop.f32.mrb[0].mxu0
  %2186 = vmatprep.mubr.f32.mxu0 0.0
  %2187 = vmatmul.mubr.f32.gmra.mrb[0].mxu0 %v1995
  %v2188 = vpop.f32.mrb[0].mxu0
  %v2189 = vadd.f32 %v1945, %v2188
  %v2190 = vpop.f32.mrb[0].mxu0
  %2191 = vmatprep.mubr.f32.mxu0 0.0
  %2192 = vmatmul.mubr.f32.gmra.mrb[0].mxu0 %v1998
  %v2193 = vpop.f32.mrb[0].mxu0
  %v2194 = vadd.f32 %v1945, %v2193
  %v2195 = vpop.f32.mrb[0].mxu0
  %2196 = vmatprep.mubr.f32.mxu0 0.0
  %2197 = vmatmul.mubr.f32.gmra.mrb[0].mxu0 %v2001
  %v2198 = vpop.f32.mrb[0].mxu0
  %v2199 = vadd.f32 %v1945, %v2198
  %v2200 = vpop.f32.mrb[0].mxu0
  %2201 = vmatprep.mubr.f32.mxu0 0.0
  %2202 = vmatmul.mubr.f32.gmra.mrb[0].mxu0 %v2004
  %v2203 = vpop.f32.mrb[0].mxu0
  %v2204 = vadd.f32 %v1945, %v2203
  %v2205 = vpop.f32.mrb[0].mxu0
  %2206 = vmatprep.mubr.f32.mxu0 0.0
  %2207 = vmatmul.mubr.f32.gmra.mrb[0].mxu0 %v2007
  %v2208 = vpop.f32.mrb[0].mxu0
  %v2209 = vadd.f32 %v1945, %v2208
  %v2210 = vpop.f32.mrb[0].mxu0
  %2211 = vmatprep.mubr.f32.mxu0 0.0
  %2212 = vmatmul.mubr.f32.gmra.mrb[0].mxu0 %v2010
  %v2213 = vpop.f32.mrb[0].mxu0
  %v2214 = vadd.f32 %v1945, %v2213
  %v2215 = vpop.f32.mrb[0].mxu0
  %2216 = vmatprep.mubr.f32.mxu0 0.0
  %2217 = vmatmul.mubr.f32.gmra.mrb[0].mxu0 %v2013
  %v2218 = vpop.f32.mrb[0].mxu0
  %v2219 = vadd.f32 %v1945, %v2218
  %v2220 = vpop.f32.mrb[0].mxu0
  %2221 = vmatprep.mubr.f32.mxu0 0.0
  %2222 = vmatmul.mubr.f32.gmra.mrb[0].mxu0 %v2016
  %v2223 = vpop.f32.mrb[0].mxu0
  %v2224 = vadd.f32 %v1945, %v2223
  %v2225 = vpop.f32.mrb[0].mxu0
  %2226 = vmatprep.mubr.f32.mxu0 0.0
  %2227 = vmatmul.mubr.f32.gmra.mrb[0].mxu0 %v2019
  %v2228 = vpop.f32.mrb[0].mxu0
  %v2229 = vadd.f32 %v1945, %v2228
  %v2230 = vpop.f32.mrb[0].mxu0
  %2231 = vmatprep.mubr.f32.mxu0 0.0
  %2232 = vmatmul.mubr.f32.gmra.mrb[0].mxu0 %v2022
  %v2233 = vpop.f32.mrb[0].mxu0
  %v2234 = vadd.f32 %v1945, %v2233
  %v2235 = vpop.f32.mrb[0].mxu0
  %2236 = vmatprep.mubr.f32.mxu0 0.0
  %2237 = vmatmul.mubr.f32.gmra.mrb[0].mxu0 %v2025
  %v2238 = vpop.f32.mrb[0].mxu0
  %v2239 = vadd.f32 %v1945, %v2238
  %v2240 = vpop.f32.mrb[0].mxu0
  %2241 = vmatprep.mubr.f32.mxu0 0.0
  %2242 = vmatmul.mubr.f32.gmra.mrb[0].mxu0 %v2028
  %v2243 = vpop.f32.mrb[0].mxu0
  %v2244 = vadd.f32 %v1945, %v2243
  %v2245 = vpop.f32.mrb[0].mxu0
  %2246 = vmatprep.mubr.f32.mxu0 0.0
  %2247 = vmatmul.mubr.f32.gmra.mrb[0].mxu0 %v2031
  %v2248 = vpop.f32.mrb[0].mxu0
  %v2249 = vadd.f32 %v1945, %v2248
  %v2250 = vpop.f32.mrb[0].mxu0
  %2251 = vmatprep.mubr.f32.mxu0 0.0
  %2252 = vmatmul.mubr.f32.gmra.mrb[0].mxu0 %v2034
  %v2253 = vpop.f32.mrb[0].mxu0
  %v2254 = vadd.f32 %v1945, %v2253
  %v2255 = vpop.f32.mrb[0].mxu0
  %2256 = vmatprep.mubr.f32.mxu0 0.0
  %2257 = vmatmul.mubr.f32.gmra.mrb[0].mxu0 %v2037
  %v2258 = vpop.f32.mrb[0].mxu0
  %v2259 = vadd.f32 %v1945, %v2258
  %v2260 = vpop.f32.mrb[0].mxu0
  %2261 = vmatprep.mubr.f32.mxu0 0.0
  %2262 = vmatmul.mubr.f32.gmra.mrb[0].mxu0 %v2040
  %v2263 = vpop.f32.mrb[0].mxu0
  %v2264 = vadd.f32 %v1945, %v2263
  %v2265 = vpop.f32.mrb[0].mxu0
  %2266 = vdwg.mxu0
  %vm2267 = vcmask 31744
  %v2268 = vsel %vm2267, %v2109, -inf
  %2269 = vmax.xlane.f32.xlu0 %v2268
  %v2270 = vpop.xlane.xlu0 %2269
  %v2271 = vsel %vm2267, %v2114, -inf
  %2272 = vmax.xlane.f32.xlu0 %v2271
  %v2273 = vpop.xlane.xlu0 %2272
  %v2274 = vsel %vm2267, %v2119, -inf
  %2275 = vmax.xlane.f32.xlu0 %v2274
  %v2276 = vpop.xlane.xlu0 %2275
  %v2277 = vsel %vm2267, %v2124, -inf
  %2278 = vmax.xlane.f32.xlu0 %v2277
  %v2279 = vpop.xlane.xlu0 %2278
  %v2280 = vsel %vm2267, %v2129, -inf
  %2281 = vmax.xlane.f32.xlu0 %v2280
  %v2282 = vpop.xlane.xlu0 %2281
  %v2283 = vsel %vm2267, %v2134, -inf
  %2284 = vmax.xlane.f32.xlu0 %v2283
  %v2285 = vpop.xlane.xlu0 %2284
  %v2286 = vsel %vm2267, %v2139, -inf
  %2287 = vmax.xlane.f32.xlu0 %v2286
  %v2288 = vpop.xlane.xlu0 %2287
  %v2289 = vsel %vm2267, %v2144, -inf
  %2290 = vmax.xlane.f32.xlu0 %v2289
  %v2291 = vpop.xlane.xlu0 %2290
  %v2292 = vsel %vm2267, %v2149, -inf
  %2293 = vmax.xlane.f32.xlu0 %v2292
  %v2294 = vpop.xlane.xlu0 %2293
  %v2295 = vsel %vm2267, %v2154, -inf
  %2296 = vmax.xlane.f32.xlu0 %v2295
  %v2297 = vpop.xlane.xlu0 %2296
  %v2298 = vsel %vm2267, %v2159, -inf
  %2299 = vmax.xlane.f32.xlu0 %v2298
  %v2300 = vpop.xlane.xlu0 %2299
  %v2301 = vsel %vm2267, %v2164, -inf
  %2302 = vmax.xlane.f32.xlu0 %v2301
  %v2303 = vpop.xlane.xlu0 %2302
  %v2304 = vsel %vm2267, %v2169, -inf
  %2305 = vmax.xlane.f32.xlu0 %v2304
  %v2306 = vpop.xlane.xlu0 %2305
  %v2307 = vsel %vm2267, %v2174, -inf
  %2308 = vmax.xlane.f32.xlu0 %v2307
  %v2309 = vpop.xlane.xlu0 %2308
  %v2310 = vsel %vm2267, %v2179, -inf
  %2311 = vmax.xlane.f32.xlu0 %v2310
  %v2312 = vpop.xlane.xlu0 %2311
  %v2313 = vsel %vm2267, %v2184, -inf
  %2314 = vmax.xlane.f32.xlu0 %v2313
  %v2315 = vpop.xlane.xlu0 %2314
  %v2316 = vsel %vm2267, %v2189, -inf
  %2317 = vmax.xlane.f32.xlu0 %v2316
  %v2318 = vpop.xlane.xlu0 %2317
  %v2319 = vsel %vm2267, %v2194, -inf
  %2320 = vmax.xlane.f32.xlu0 %v2319
  %v2321 = vpop.xlane.xlu0 %2320
  %v2322 = vsel %vm2267, %v2199, -inf
  %2323 = vmax.xlane.f32.xlu0 %v2322
  %v2324 = vpop.xlane.xlu0 %2323
  %v2325 = vsel %vm2267, %v2204, -inf
  %2326 = vmax.xlane.f32.xlu0 %v2325
  %v2327 = vpop.xlane.xlu0 %2326
  %v2328 = vsel %vm2267, %v2209, -inf
  %2329 = vmax.xlane.f32.xlu0 %v2328
  %v2330 = vpop.xlane.xlu0 %2329
  %v2331 = vsel %vm2267, %v2214, -inf
  %2332 = vmax.xlane.f32.xlu0 %v2331
  %v2333 = vpop.xlane.xlu0 %2332
  %v2334 = vsel %vm2267, %v2219, -inf
  %2335 = vmax.xlane.f32.xlu0 %v2334
  %v2336 = vpop.xlane.xlu0 %2335
  %v2337 = vsel %vm2267, %v2224, -inf
  %2338 = vmax.xlane.f32.xlu0 %v2337
  %v2339 = vpop.xlane.xlu0 %2338
  %v2340 = vsel %vm2267, %v2229, -inf
  %2341 = vmax.xlane.f32.xlu0 %v2340
  %v2342 = vpop.xlane.xlu0 %2341
  %v2343 = vsel %vm2267, %v2234, -inf
  %2344 = vmax.xlane.f32.xlu0 %v2343
  %v2345 = vpop.xlane.xlu0 %2344
  %v2346 = vsel %vm2267, %v2239, -inf
  %2347 = vmax.xlane.f32.xlu0 %v2346
  %v2348 = vpop.xlane.xlu0 %2347
  %v2349 = vsel %vm2267, %v2244, -inf
  %2350 = vmax.xlane.f32.xlu0 %v2349
  %v2351 = vpop.xlane.xlu0 %2350
  %v2352 = vsel %vm2267, %v2249, -inf
  %2353 = vmax.xlane.f32.xlu0 %v2352
  %v2354 = vpop.xlane.xlu0 %2353
  %v2355 = vsel %vm2267, %v2254, -inf
  %2356 = vmax.xlane.f32.xlu0 %v2355
  %v2357 = vpop.xlane.xlu0 %2356
  %v2358 = vsel %vm2267, %v2259, -inf
  %2359 = vmax.xlane.f32.xlu0 %v2358
  %v2360 = vpop.xlane.xlu0 %2359
  %v2361 = vsel %vm2267, %v2264, -inf
  %2362 = vmax.xlane.f32.xlu0 %v2361
  %v2363 = vpop.xlane.xlu0 %2362
  %v2364 = vsub.f32 %v2109, %v2270
  %v2365 = vsub.f32 %v2114, %v2273
  %v2366 = vsub.f32 %v2119, %v2276
  %v2367 = vsub.f32 %v2124, %v2279
  %v2368 = vsub.f32 %v2129, %v2282
  %v2369 = vsub.f32 %v2134, %v2285
  %v2370 = vsub.f32 %v2139, %v2288
  %v2371 = vsub.f32 %v2144, %v2291
  %v2372 = vsub.f32 %v2149, %v2294
  %v2373 = vsub.f32 %v2154, %v2297
  %v2374 = vsub.f32 %v2159, %v2300
  %v2375 = vsub.f32 %v2164, %v2303
  %v2376 = vsub.f32 %v2169, %v2306
  %v2377 = vsub.f32 %v2174, %v2309
  %v2378 = vsub.f32 %v2179, %v2312
  %v2379 = vsub.f32 %v2184, %v2315
  %v2380 = vsub.f32 %v2189, %v2318
  %v2381 = vsub.f32 %v2194, %v2321
  %v2382 = vsub.f32 %v2199, %v2324
  %v2383 = vsub.f32 %v2204, %v2327
  %v2384 = vsub.f32 %v2209, %v2330
  %v2385 = vsub.f32 %v2214, %v2333
  %v2386 = vsub.f32 %v2219, %v2336
  %v2387 = vsub.f32 %v2224, %v2339
  %v2388 = vsub.f32 %v2229, %v2342
  %v2389 = vsub.f32 %v2234, %v2345
  %v2390 = vsub.f32 %v2239, %v2348
  %v2391 = vsub.f32 %v2244, %v2351
  %v2392 = vsub.f32 %v2249, %v2354
  %v2393 = vsub.f32 %v2254, %v2357
  %v2394 = vsub.f32 %v2259, %v2360
  %v2395 = vsub.f32 %v2264, %v2363
  %v2396 = vmul.f32 %v2364, 1.442695
  %v2397 = vpow.pop %v2396
  %v2398 = vmul.f32 %v2365, 1.442695
  %v2399 = vpow.pop %v2398
  %v2400 = vmul.f32 %v2366, 1.442695
  %v2401 = vpow.pop %v2400
  %v2402 = vmul.f32 %v2367, 1.442695
  %v2403 = vpow.pop %v2402
  %v2404 = vmul.f32 %v2368, 1.442695
  %v2405 = vpow.pop %v2404
  %v2406 = vmul.f32 %v2369, 1.442695
  %v2407 = vpow.pop %v2406
  %v2408 = vmul.f32 %v2370, 1.442695
  %v2409 = vpow.pop %v2408
  %v2410 = vmul.f32 %v2371, 1.442695
  %v2411 = vpow.pop %v2410
  %v2412 = vmul.f32 %v2372, 1.442695
  %v2413 = vpow.pop %v2412
  %v2414 = vmul.f32 %v2373, 1.442695
  %v2415 = vpow.pop %v2414
  %v2416 = vmul.f32 %v2374, 1.442695
  %v2417 = vpow.pop %v2416
  %v2418 = vmul.f32 %v2375, 1.442695
  %v2419 = vpow.pop %v2418
  %v2420 = vmul.f32 %v2376, 1.442695
  %v2421 = vpow.pop %v2420
  %v2422 = vmul.f32 %v2377, 1.442695
  %v2423 = vpow.pop %v2422
  %v2424 = vmul.f32 %v2378, 1.442695
  %v2425 = vpow.pop %v2424
  %v2426 = vmul.f32 %v2379, 1.442695
  %v2427 = vpow.pop %v2426
  %v2428 = vmul.f32 %v2380, 1.442695
  %v2429 = vpow.pop %v2428
  %v2430 = vmul.f32 %v2381, 1.442695
  %v2431 = vpow.pop %v2430
  %v2432 = vmul.f32 %v2382, 1.442695
  %v2433 = vpow.pop %v2432
  %v2434 = vmul.f32 %v2383, 1.442695
  %v2435 = vpow.pop %v2434
  %v2436 = vmul.f32 %v2384, 1.442695
  %v2437 = vpow.pop %v2436
  %v2438 = vmul.f32 %v2385, 1.442695
  %v2439 = vpow.pop %v2438
  %v2440 = vmul.f32 %v2386, 1.442695
  %v2441 = vpow.pop %v2440
  %v2442 = vmul.f32 %v2387, 1.442695
  %v2443 = vpow.pop %v2442
  %v2444 = vmul.f32 %v2388, 1.442695
  %v2445 = vpow.pop %v2444
  %v2446 = vmul.f32 %v2389, 1.442695
  %v2447 = vpow.pop %v2446
  %v2448 = vmul.f32 %v2390, 1.442695
  %v2449 = vpow.pop %v2448
  %v2450 = vmul.f32 %v2391, 1.442695
  %v2451 = vpow.pop %v2450
  %v2452 = vmul.f32 %v2392, 1.442695
  %v2453 = vpow.pop %v2452
  %v2454 = vmul.f32 %v2393, 1.442695
  %v2455 = vpow.pop %v2454
  %v2456 = vmul.f32 %v2394, 1.442695
  %v2457 = vpow.pop %v2456
  %v2458 = vmul.f32 %v2395, 1.442695
  %v2459 = vpow.pop %v2458
  %v2460 = vsel %vm2267, %v2397, 0.0
  %2461 = vadd.xlane.f32.xlu0 %v2460
  %v2462 = vpop.xlane.xlu0 %2461
  %v2463 = vsel %vm2267, %v2399, 0.0
  %2464 = vadd.xlane.f32.xlu0 %v2463
  %v2465 = vpop.xlane.xlu0 %2464
  %v2466 = vsel %vm2267, %v2401, 0.0
  %2467 = vadd.xlane.f32.xlu0 %v2466
  %v2468 = vpop.xlane.xlu0 %2467
  %v2469 = vsel %vm2267, %v2403, 0.0
  %2470 = vadd.xlane.f32.xlu0 %v2469
  %v2471 = vpop.xlane.xlu0 %2470
  %v2472 = vsel %vm2267, %v2405, 0.0
  %2473 = vadd.xlane.f32.xlu0 %v2472
  %v2474 = vpop.xlane.xlu0 %2473
  %v2475 = vsel %vm2267, %v2407, 0.0
  %2476 = vadd.xlane.f32.xlu0 %v2475
  %v2477 = vpop.xlane.xlu0 %2476
  %v2478 = vsel %vm2267, %v2409, 0.0
  %2479 = vadd.xlane.f32.xlu0 %v2478
  %v2480 = vpop.xlane.xlu0 %2479
  %v2481 = vsel %vm2267, %v2411, 0.0
  %2482 = vadd.xlane.f32.xlu0 %v2481
  %v2483 = vpop.xlane.xlu0 %2482
  %v2484 = vsel %vm2267, %v2413, 0.0
  %2485 = vadd.xlane.f32.xlu0 %v2484
  %v2486 = vpop.xlane.xlu0 %2485
  %v2487 = vsel %vm2267, %v2415, 0.0
  %2488 = vadd.xlane.f32.xlu0 %v2487
  %v2489 = vpop.xlane.xlu0 %2488
  %v2490 = vsel %vm2267, %v2417, 0.0
  %2491 = vadd.xlane.f32.xlu0 %v2490
  %v2492 = vpop.xlane.xlu0 %2491
  %v2493 = vsel %vm2267, %v2419, 0.0
  %2494 = vadd.xlane.f32.xlu0 %v2493
  %v2495 = vpop.xlane.xlu0 %2494
  %v2496 = vsel %vm2267, %v2421, 0.0
  %2497 = vadd.xlane.f32.xlu0 %v2496
  %v2498 = vpop.xlane.xlu0 %2497
  %v2499 = vsel %vm2267, %v2423, 0.0
  %2500 = vadd.xlane.f32.xlu0 %v2499
  %v2501 = vpop.xlane.xlu0 %2500
  %v2502 = vsel %vm2267, %v2425, 0.0
  %2503 = vadd.xlane.f32.xlu0 %v2502
  %v2504 = vpop.xlane.xlu0 %2503
  %v2505 = vsel %vm2267, %v2427, 0.0
  %2506 = vadd.xlane.f32.xlu0 %v2505
  %v2507 = vpop.xlane.xlu0 %2506
  %v2508 = vsel %vm2267, %v2429, 0.0
  %2509 = vadd.xlane.f32.xlu0 %v2508
  %v2510 = vpop.xlane.xlu0 %2509
  %v2511 = vsel %vm2267, %v2431, 0.0
  %2512 = vadd.xlane.f32.xlu0 %v2511
  %v2513 = vpop.xlane.xlu0 %2512
  %v2514 = vsel %vm2267, %v2433, 0.0
  %2515 = vadd.xlane.f32.xlu0 %v2514
  %v2516 = vpop.xlane.xlu0 %2515
  %v2517 = vsel %vm2267, %v2435, 0.0
  %2518 = vadd.xlane.f32.xlu0 %v2517
  %v2519 = vpop.xlane.xlu0 %2518
  %v2520 = vsel %vm2267, %v2437, 0.0
  %2521 = vadd.xlane.f32.xlu0 %v2520
  %v2522 = vpop.xlane.xlu0 %2521
  %v2523 = vsel %vm2267, %v2439, 0.0
  %2524 = vadd.xlane.f32.xlu0 %v2523
  %v2525 = vpop.xlane.xlu0 %2524
  %v2526 = vsel %vm2267, %v2441, 0.0
  %2527 = vadd.xlane.f32.xlu0 %v2526
  %v2528 = vpop.xlane.xlu0 %2527
  %v2529 = vsel %vm2267, %v2443, 0.0
  %2530 = vadd.xlane.f32.xlu0 %v2529
  %v2531 = vpop.xlane.xlu0 %2530
  %v2532 = vsel %vm2267, %v2445, 0.0
  %2533 = vadd.xlane.f32.xlu0 %v2532
  %v2534 = vpop.xlane.xlu0 %2533
  %v2535 = vsel %vm2267, %v2447, 0.0
  %2536 = vadd.xlane.f32.xlu0 %v2535
  %v2537 = vpop.xlane.xlu0 %2536
  %v2538 = vsel %vm2267, %v2449, 0.0
  %2539 = vadd.xlane.f32.xlu0 %v2538
  %v2540 = vpop.xlane.xlu0 %2539
  %v2541 = vsel %vm2267, %v2451, 0.0
  %2542 = vadd.xlane.f32.xlu0 %v2541
  %v2543 = vpop.xlane.xlu0 %2542
  %v2544 = vsel %vm2267, %v2453, 0.0
  %2545 = vadd.xlane.f32.xlu0 %v2544
  %v2546 = vpop.xlane.xlu0 %2545
  %v2547 = vsel %vm2267, %v2455, 0.0
  %2548 = vadd.xlane.f32.xlu0 %v2547
  %v2549 = vpop.xlane.xlu0 %2548
  %v2550 = vsel %vm2267, %v2457, 0.0
  %2551 = vadd.xlane.f32.xlu0 %v2550
  %v2552 = vpop.xlane.xlu0 %2551
  %v2553 = vsel %vm2267, %v2459, 0.0
  %2554 = vadd.xlane.f32.xlu0 %v2553
  %v2555 = vpop.xlane.xlu0 %2554
  %v2556 = vrcp.pop %v2462
  %v2557 = vmul.f32 %v2397, %v2556
  %v2558 = vrcp.pop %v2465
  %v2559 = vmul.f32 %v2399, %v2558
  %v2560 = vrcp.pop %v2468
  %v2561 = vmul.f32 %v2401, %v2560
  %v2562 = vrcp.pop %v2471
  %v2563 = vmul.f32 %v2403, %v2562
  %v2564 = vrcp.pop %v2474
  %v2565 = vmul.f32 %v2405, %v2564
  %v2566 = vrcp.pop %v2477
  %v2567 = vmul.f32 %v2407, %v2566
  %v2568 = vrcp.pop %v2480
  %v2569 = vmul.f32 %v2409, %v2568
  %v2570 = vrcp.pop %v2483
  %v2571 = vmul.f32 %v2411, %v2570
  %v2572 = vrcp.pop %v2486
  %v2573 = vmul.f32 %v2413, %v2572
  %v2574 = vrcp.pop %v2489
  %v2575 = vmul.f32 %v2415, %v2574
  %v2576 = vrcp.pop %v2492
  %v2577 = vmul.f32 %v2417, %v2576
  %v2578 = vrcp.pop %v2495
  %v2579 = vmul.f32 %v2419, %v2578
  %v2580 = vrcp.pop %v2498
  %v2581 = vmul.f32 %v2421, %v2580
  %v2582 = vrcp.pop %v2501
  %v2583 = vmul.f32 %v2423, %v2582
  %v2584 = vrcp.pop %v2504
  %v2585 = vmul.f32 %v2425, %v2584
  %v2586 = vrcp.pop %v2507
  %v2587 = vmul.f32 %v2427, %v2586
  %v2588 = vrcp.pop %v2510
  %v2589 = vmul.f32 %v2429, %v2588
  %v2590 = vrcp.pop %v2513
  %v2591 = vmul.f32 %v2431, %v2590
  %v2592 = vrcp.pop %v2516
  %v2593 = vmul.f32 %v2433, %v2592
  %v2594 = vrcp.pop %v2519
  %v2595 = vmul.f32 %v2435, %v2594
  %v2596 = vrcp.pop %v2522
  %v2597 = vmul.f32 %v2437, %v2596
  %v2598 = vrcp.pop %v2525
  %v2599 = vmul.f32 %v2439, %v2598
  %v2600 = vrcp.pop %v2528
  %v2601 = vmul.f32 %v2441, %v2600
  %v2602 = vrcp.pop %v2531
  %v2603 = vmul.f32 %v2443, %v2602
  %v2604 = vrcp.pop %v2534
  %v2605 = vmul.f32 %v2445, %v2604
  %v2606 = vrcp.pop %v2537
  %v2607 = vmul.f32 %v2447, %v2606
  %v2608 = vrcp.pop %v2540
  %v2609 = vmul.f32 %v2449, %v2608
  %v2610 = vrcp.pop %v2543
  %v2611 = vmul.f32 %v2451, %v2610
  %v2612 = vrcp.pop %v2546
  %v2613 = vmul.f32 %v2453, %v2612
  %v2614 = vrcp.pop %v2549
  %v2615 = vmul.f32 %v2455, %v2614
  %v2616 = vrcp.pop %v2552
  %v2617 = vmul.f32 %v2457, %v2616
  %v2618 = vrcp.pop %v2555
  %v2619 = vmul.f32 %v2459, %v2618
  %2620 = vst.msk [vmem:[%s4] sm:$0xff] %vm2267, %v2557
  %2621 = vst.msk [vmem:[%s4 + $0x8] sm:$0xff] %vm2267, %v2559
  %2622 = vst.msk [vmem:[%s4 + $0x10] sm:$0xff] %vm2267, %v2561
  %2623 = vst.msk [vmem:[%s4 + $0x18] sm:$0xff] %vm2267, %v2563
  %2624 = vst.msk [vmem:[%s4 + $0x20] sm:$0xff] %vm2267, %v2565
  %2625 = vst.msk [vmem:[%s4 + $0x28] sm:$0xff] %vm2267, %v2567
  %2626 = vst.msk [vmem:[%s4 + $0x30] sm:$0xff] %vm2267, %v2569
  %2627 = vst.msk [vmem:[%s4 + $0x38] sm:$0xff] %vm2267, %v2571
  %2628 = vst.msk [vmem:[%s4 + $0x40] sm:$0xff] %vm2267, %v2573
  %2629 = vst.msk [vmem:[%s4 + $0x48] sm:$0xff] %vm2267, %v2575
  %2630 = vst.msk [vmem:[%s4 + $0x50] sm:$0xff] %vm2267, %v2577
  %2631 = vst.msk [vmem:[%s4 + $0x58] sm:$0xff] %vm2267, %v2579
  %2632 = vst.msk [vmem:[%s4 + $0x60] sm:$0xff] %vm2267, %v2581
  %2633 = vst.msk [vmem:[%s4 + $0x68] sm:$0xff] %vm2267, %v2583
  %2634 = vst.msk [vmem:[%s4 + $0x70] sm:$0xff] %vm2267, %v2585
  %2635 = vst.msk [vmem:[%s4 + $0x78] sm:$0xff] %vm2267, %v2587
  %2636 = vst.msk [vmem:[%s4 + $0x80] sm:$0xff] %vm2267, %v2589
  %2637 = vst.msk [vmem:[%s4 + $0x88] sm:$0xff] %vm2267, %v2591
  %2638 = vst.msk [vmem:[%s4 + $0x90] sm:$0xff] %vm2267, %v2593
  %2639 = vst.msk [vmem:[%s4 + $0x98] sm:$0xff] %vm2267, %v2595
  %2640 = vst.msk [vmem:[%s4 + $0xa0] sm:$0xff] %vm2267, %v2597
  %2641 = vst.msk [vmem:[%s4 + $0xa8] sm:$0xff] %vm2267, %v2599
  %2642 = vst.msk [vmem:[%s4 + $0xb0] sm:$0xff] %vm2267, %v2601
  %2643 = vst.msk [vmem:[%s4 + $0xb8] sm:$0xff] %vm2267, %v2603
  %2644 = vst.msk [vmem:[%s4 + $0xc0] sm:$0xff] %vm2267, %v2605
  %2645 = vst.msk [vmem:[%s4 + $0xc8] sm:$0xff] %vm2267, %v2607
  %2646 = vst.msk [vmem:[%s4 + $0xd0] sm:$0xff] %vm2267, %v2609
  %2647 = vst.msk [vmem:[%s4 + $0xd8] sm:$0xff] %vm2267, %v2611
  %2648 = vst.msk [vmem:[%s4 + $0xe0] sm:$0xff] %vm2267, %v2613
  %2649 = vst.msk [vmem:[%s4 + $0xe8] sm:$0xff] %vm2267, %v2615
  %2650 = vst.msk [vmem:[%s4 + $0xf0] sm:$0xff] %vm2267, %v2617
  %2651 = vst.msk [vmem:[%s4 + $0xf8] sm:$0xff] %vm2267, %v2619
  // Predicated region
  $region18: #{tpu_custom_call.1} parent=0 // pred_check
    _
  $region19: #{tpu_custom_call.1} parent=0 // pred_check_branch
    %2653 = sbr.rel (0) target = $region21
  $region20: #{tpu_custom_call.1} parent=0 // pred_region
    _
  $region21: #{tpu_custom_call.1} parent=0 // pred_fallthru
    _
  // Predicated region
  $region22: #{tpu_custom_call.1} parent=0 // pred_check
    _
  $region23: #{tpu_custom_call.1} parent=0 // pred_check_branch
    %2655 = sbr.rel (0) target = $region25
  $region24: #{tpu_custom_call.1} parent=0 // pred_region
    _
  $region25: #{tpu_custom_call.1} parent=0 // pred_fallthru
    _

</llo_original>
